<compile_context>
chip_gen: v6e
topology: v6e:2x2x1
jax: 0.10.0
libtpu: 0.0.40
codegen_flags: <defaults>
</compile_context>

<pallas_src>
import functools

import jax
import jax.numpy as jnp
from jax.experimental import pallas as pl
from jax.experimental.pallas import tpu as pltpu


# ----------------------------------------------------------------------------
# Fused kernel: in-kernel hash -> one-hot @ folded(table@W1) -> +b1 -> ReLU ->
# w2 reduce.  Batch lives on the LANE axis end-to-end.
# ----------------------------------------------------------------------------
def _make_fused_kernel(slots, emb_levels):
    s_slots = len(slots)
    levels_is_pow2 = (emb_levels & (emb_levels - 1)) == 0

    def kernel(x_ref, ptab_t_ref, b1_ref, w2_ref, b2_ref, o_ref):
        # x_ref     : (C, TILE_B)   int32  raw categorical ids, batch on lanes
        # ptab_t_ref: (H, S*L)      bf16   folded (table @ W1_slot), transposed
        # b1_ref    : (H, 1)        f32
        # w2_ref    : (H, 1)        f32    Linear(64,1) weight as a column
        # b2_ref    : (1, 1)        f32
        # o_ref     : (1, TILE_B)   f32    lane-dense output row
        _, tile_b = x_ref.shape
        h_dim, sl = ptab_t_ref.shape
        levels = sl // s_slots

        xb = x_ref[...]                                            # (C, TILE_B)

        # In-kernel affine hash, per slot (col/seed are compile-time constants).
        raw = jnp.concatenate(
            [xb[col:col + 1, :] * jnp.int32(f + 1) + jnp.int32(f)
             for col, f in slots],
            axis=0,
        )                                                          # (S, TILE_B)
        if levels_is_pow2:
            ids = raw & jnp.int32(emb_levels - 1)
        else:
            # Inputs are non-negative, so truncating rem == floor mod here.
            ids = jax.lax.rem(raw, jnp.int32(emb_levels))

        # Single-pass one-hot build: iota over the L axis, one compare, reshape.
        iota = jax.lax.broadcasted_iota(
            jnp.int32, (s_slots, levels, tile_b), 1)
        onehot = (iota == ids[:, None, :]).astype(jnp.bfloat16)
        onehot = onehot.reshape(s_slots * levels, tile_b)          # (S*L, TILE_B)

        # Gather + fc1 as one MXU matmul against the VMEM-resident folded table.
        h = jnp.dot(ptab_t_ref[...], onehot,
                    preferred_element_type=jnp.float32)            # (H, TILE_B)
        h = jnp.maximum(h + b1_ref[...], 0.0)                      # bias + ReLU

        # Linear(64,1): VPU multiply + cross-sublane reduce -- no N=1 matmul.
        y = jnp.sum(h * w2_ref[...], axis=0, keepdims=True)        # (1, TILE_B)
        o_ref[...] = y + b2_ref[...]

    return kernel


def _fused_mlp(x_t, ptab_t, b1_col, w2_col, b2, slots, emb_levels, *, tile_b):
    n_cols, b_pad = x_t.shape
    h_dim, sl = ptab_t.shape
    grid = (b_pad // tile_b,)
    resident = lambda shape: pl.BlockSpec(shape, lambda i: (0, 0))
    kernel = _make_fused_kernel(slots, emb_levels)
    return pl.pallas_call(
        kernel,
        out_shape=jax.ShapeDtypeStruct((1, b_pad), jnp.float32),
        grid=grid,
        in_specs=[
            # Streamed raw-id block (default double-buffering is plenty).
            pl.BlockSpec((n_cols, tile_b), lambda i: (0, i)),
            resident((h_dim, sl)),      # folded bf16 table (VMEM-resident)
            resident((h_dim, 1)),       # b1
            resident((h_dim, 1)),       # w2
            resident((1, 1)),           # b2
        ],
        out_specs=pl.BlockSpec((1, tile_b), lambda i: (0, i)),
        compiler_params=pltpu.CompilerParams(
            dimension_semantics=("parallel",)),
    )(x_t, ptab_t, b1_col, w2_col, b2)


# ----------------------------------------------------------------------------
# Full forward: fold table into fc1 (tiny host-side einsum), then fused kernel.
# ----------------------------------------------------------------------------
@functools.partial(jax.jit, static_argnames=("col_map", "emb_levels", "tile_b"))
def simple_nn_forward(x, params, col_map, emb_levels, tile_b=1024):
    emb = params["emb"]                        # (L, E)
    w1 = params["w1"]                          # (in_dim, H) = (S*E, H)
    levels, emb_dim = emb.shape
    hidden = w1.shape[1]
    batch = x.shape[0]

    # Global slot order == the concat order in the reference forward.
    slots = tuple((col, f) for col, fnum in col_map for f in fnum)
    n_slots = len(slots)

    # Raw ids, batch on the lane axis: (C, B) int32; pad batch to tile_b.
    x_t = x.T.astype(jnp.int32)
    b_pad = ((batch + tile_b - 1) // tile_b) * tile_b
    if b_pad != batch:
        x_t = jnp.pad(x_t, ((0, 0), (0, b_pad - batch)))

    # Fold the embedding table into fc1: per-slot premultiplied tables,
    # transposed so batch lives on lanes inside the kernel; stored in bf16
    # (the 0/1 one-hot is exact, accumulation stays f32).
    w1_slots = w1.reshape(n_slots, emb_dim, hidden)
    ptab = jnp.einsum("le,seh->slh", emb, w1_slots)      # (S, L, H) f32
    ptab_t = ptab.reshape(n_slots * levels, hidden).T.astype(jnp.bfloat16)

    b1_col = params["b1"].reshape(hidden, 1)
    w2_col = params["w2"].reshape(hidden, 1)
    b2 = params["b2"].reshape(1, 1)

    out_row = _fused_mlp(x_t, ptab_t, b1_col, w2_col, b2,
                         slots, emb_levels, tile_b=tile_b)
    return out_row[0, :batch][:, None]                   # (B, 1)


# ----------------------------------------------------------------------------
# Pure-JAX reference (un-fused, un-folded, f32) for correctness checking.
# ----------------------------------------------------------------------------
def reference_forward(x, params, col_map, emb_levels):
    feats = []
    for col, fnum in col_map:
        ids = x[:, col]
        for f in fnum:
            idx = (ids * (f + 1) + f) % emb_levels
            feats.append(params["emb"][idx])             # (B, E)
    x_ = jnp.concatenate(feats, axis=1)                  # (B, in_dim)
    h = jnp.maximum(x_ @ params["w1"] + params["b1"], 0.0)
    return h @ params["w2"] + params["b2"]               # (B, 1)


# ----------------------------------------------------------------------------
# Deterministic parameter init (shapes implied by the module __init__).
# ----------------------------------------------------------------------------
def init_params(key, emb_levels, emb_dim, col_map, hidden=64):
    in_dim = sum(len(fnum) for _, fnum in col_map) * emb_dim
    k_emb, k_w1, k_b1, k_w2, k_b2 = jax.random.split(key, 5)
    lim1 = 1.0 / jnp.sqrt(in_dim)
    lim2 = 1.0 / jnp.sqrt(hidden)
    return {
        "emb": jax.random.normal(k_emb, (emb_levels, emb_dim), jnp.float32) * 0.1,
        "w1": jax.random.uniform(k_w1, (in_dim, hidden), jnp.float32, -lim1, lim1),
        "b1": jax.random.uniform(k_b1, (1, hidden), jnp.float32, -lim1, lim1),
        "w2": jax.random.uniform(k_w2, (hidden, 1), jnp.float32, -lim2, lim2),
        "b2": jax.random.uniform(k_b2, (1, 1), jnp.float32, -lim2, lim2),
    }


if __name__ == "__main__":
    key = jax.random.PRNGKey(0)

    # Small synthetic configuration (model dims stay tiny; batch gives an
    # even grid of 2 steps at TILE_B=1024 for v7x's two TensorCores).
    emb_levels = 32
    emb_dim = 8
    # col_map: (column index in x, tuple of hash seeds for that column)
    col_map = ((0, (0, 1)), (1, (0, 1, 2)))    # in_dim = (2 + 3) * 8 = 40
    batch = 2048
    tile_b = 1024

    k_param, k_x = jax.random.split(key)
    params = init_params(k_param, emb_levels, emb_dim, col_map)

    # Categorical input ids: (batch, num_cols) int32
    x = jax.random.randint(k_x, (batch, len(col_map)), 0, emb_levels, jnp.int32)

    out = simple_nn_forward(x, params, col_map, emb_levels, tile_b)
    out = jax.block_until_ready(out)

    ref = reference_forward(x, params, col_map, emb_levels)
    assert out.shape == (batch, 1), out.shape
    assert out.dtype == jnp.float32, out.dtype
    assert jnp.allclose(out, ref, rtol=2e-2, atol=5e-3), \
        float(jnp.max(jnp.abs(out - ref)))
    print("KERNEL_OK")
</pallas_src>

<mosaic_0001>
module attributes {stable_mosaic.version = 11 : i64} {
  func.func @kernel(%arg0: i32, %arg1: memref<2x1024xi32, #tpu.memory_space<vmem>>, %arg2: memref<64x160xbf16, #tpu.memory_space<vmem>>, %arg3: memref<64x1xf32, #tpu.memory_space<vmem>>, %arg4: memref<64x1xf32, #tpu.memory_space<vmem>>, %arg5: memref<1x1xf32, #tpu.memory_space<vmem>>, %arg6: memref<1x1024xf32, #tpu.memory_space<vmem>>) attributes {dimension_semantics = [#tpu.dimension_semantics<parallel>], iteration_bounds = array<i64: 2>, scalar_prefetch = 0 : i64, scratch_operands = 0 : i64, tpu.core_type = #tpu.core_type<tc>, window_params = [{transform_indices = @transform_0, window_bounds = array<i64: 2, 1024>}, {pipeline_mode = #tpu.pipeline_mode<synchronous>, transform_indices = @transform_1, window_bounds = array<i64: 64, 160>}, {pipeline_mode = #tpu.pipeline_mode<synchronous>, transform_indices = @transform_2, window_bounds = array<i64: 64, 1>}, {pipeline_mode = #tpu.pipeline_mode<synchronous>, transform_indices = @transform_3, window_bounds = array<i64: 64, 1>}, {pipeline_mode = #tpu.pipeline_mode<synchronous>, transform_indices = @transform_4, window_bounds = array<i64: 1, 1>}, {transform_indices = @transform_5, window_bounds = array<i64: 1, 1024>}]} {
    %c0 = arith.constant 0 : index
    %c0_0 = arith.constant 0 : index
    %0 = vector.load %arg1[%c0, %c0_0] : memref<2x1024xi32, #tpu.memory_space<vmem>>, vector<2x1024xi32>
    %1 = vector.extract_strided_slice %0 {offsets = [0, 0], sizes = [1, 1024], strides = [1, 1]} : vector<2x1024xi32> to vector<1x1024xi32>
    %c1_i32 = arith.constant 1 : i32
    %2 = vector.broadcast %c1_i32 : i32 to vector<1x1024xi32>
    %3 = arith.muli %1, %2 : vector<1x1024xi32>
    %c0_i32 = arith.constant 0 : i32
    %4 = vector.broadcast %c0_i32 : i32 to vector<1x1024xi32>
    %5 = arith.addi %3, %4 : vector<1x1024xi32>
    %6 = vector.extract_strided_slice %0 {offsets = [0, 0], sizes = [1, 1024], strides = [1, 1]} : vector<2x1024xi32> to vector<1x1024xi32>
    %c2_i32 = arith.constant 2 : i32
    %7 = vector.broadcast %c2_i32 : i32 to vector<1x1024xi32>
    %8 = arith.muli %6, %7 : vector<1x1024xi32>
    %c1_i32_1 = arith.constant 1 : i32
    %9 = vector.broadcast %c1_i32_1 : i32 to vector<1x1024xi32>
    %10 = arith.addi %8, %9 : vector<1x1024xi32>
    %11 = vector.extract_strided_slice %0 {offsets = [1, 0], sizes = [1, 1024], strides = [1, 1]} : vector<2x1024xi32> to vector<1x1024xi32>
    %c1_i32_2 = arith.constant 1 : i32
    %12 = vector.broadcast %c1_i32_2 : i32 to vector<1x1024xi32>
    %13 = arith.muli %11, %12 : vector<1x1024xi32>
    %c0_i32_3 = arith.constant 0 : i32
    %14 = vector.broadcast %c0_i32_3 : i32 to vector<1x1024xi32>
    %15 = arith.addi %13, %14 : vector<1x1024xi32>
    %16 = vector.extract_strided_slice %0 {offsets = [1, 0], sizes = [1, 1024], strides = [1, 1]} : vector<2x1024xi32> to vector<1x1024xi32>
    %c2_i32_4 = arith.constant 2 : i32
    %17 = vector.broadcast %c2_i32_4 : i32 to vector<1x1024xi32>
    %18 = arith.muli %16, %17 : vector<1x1024xi32>
    %c1_i32_5 = arith.constant 1 : i32
    %19 = vector.broadcast %c1_i32_5 : i32 to vector<1x1024xi32>
    %20 = arith.addi %18, %19 : vector<1x1024xi32>
    %21 = vector.extract_strided_slice %0 {offsets = [1, 0], sizes = [1, 1024], strides = [1, 1]} : vector<2x1024xi32> to vector<1x1024xi32>
    %c3_i32 = arith.constant 3 : i32
    %22 = vector.broadcast %c3_i32 : i32 to vector<1x1024xi32>
    %23 = arith.muli %21, %22 : vector<1x1024xi32>
    %c2_i32_6 = arith.constant 2 : i32
    %24 = vector.broadcast %c2_i32_6 : i32 to vector<1x1024xi32>
    %25 = arith.addi %23, %24 : vector<1x1024xi32>
    %26 = tpu.concatenate %5, %10, %15, %20, %25 in 0 : vector<1x1024xi32>, vector<1x1024xi32>, vector<1x1024xi32>, vector<1x1024xi32>, vector<1x1024xi32> -> vector<5x1024xi32>
    %c31_i32 = arith.constant 31 : i32
    %27 = vector.broadcast %c31_i32 : i32 to vector<5x1024xi32>
    %28 = arith.andi %26, %27 : vector<5x1024xi32>
    %29 = tpu.iota {dimensions = array<i32: 1>} : vector<5x32x1024xi32>
    %30 = vector.shape_cast %28 : vector<5x1024xi32> to vector<5x1x1024xi32>
    %31 = vector.broadcast %30 : vector<5x1x1024xi32> to vector<5x32x1024xi32>
    %32 = arith.cmpi eq, %29, %31 : vector<5x32x1024xi32>
    %33 = arith.extui %32 : vector<5x32x1024xi1> to vector<5x32x1024xi32>
    %34 = arith.sitofp %33 : vector<5x32x1024xi32> to vector<5x32x1024xf32>
    %35 = arith.truncf %34 : vector<5x32x1024xf32> to vector<5x32x1024xbf16>
    %36 = vector.shape_cast %35 : vector<5x32x1024xbf16> to vector<160x1024xbf16>
    %c0_7 = arith.constant 0 : index
    %c0_8 = arith.constant 0 : index
    %37 = vector.load %arg2[%c0_7, %c0_8] : memref<64x160xbf16, #tpu.memory_space<vmem>>, vector<64x160xbf16>
    %cst = arith.constant dense<0.000000e+00> : vector<64x1024xf32>
    %38 = tpu.matmul %37, %36, %cst {dimension_numbers = #tpu.dot_dimension_numbers<[1], [0], [0], [1], [0, 0, 1, 1], [], []>} : vector<64x160xbf16>, vector<160x1024xbf16>, vector<64x1024xf32> -> vector<64x1024xf32>
    %c0_9 = arith.constant 0 : index
    %c0_10 = arith.constant 0 : index
    %39 = vector.load %arg3[%c0_9, %c0_10] : memref<64x1xf32, #tpu.memory_space<vmem>>, vector<64x1xf32>
    %40 = vector.broadcast %39 : vector<64x1xf32> to vector<64x1024xf32>
    %41 = arith.addf %38, %40 : vector<64x1024xf32>
    %cst_11 = arith.constant 0.000000e+00 : f32
    %42 = vector.broadcast %cst_11 : f32 to vector<64x1024xf32>
    %43 = arith.maximumf %41, %42 : vector<64x1024xf32>
    %c0_12 = arith.constant 0 : index
    %c0_13 = arith.constant 0 : index
    %44 = vector.load %arg4[%c0_12, %c0_13] : memref<64x1xf32, #tpu.memory_space<vmem>>, vector<64x1xf32>
    %45 = vector.broadcast %44 : vector<64x1xf32> to vector<64x1024xf32>
    %46 = arith.mulf %43, %45 : vector<64x1024xf32>
    %cst_14 = arith.constant dense<0.000000e+00> : vector<1024xf32>
    %47 = vector.multi_reduction <add>, %46, %cst_14 [0] : vector<64x1024xf32> to vector<1024xf32>
    %48 = vector.shape_cast %47 : vector<1024xf32> to vector<1x1024xf32>
    %c0_15 = arith.constant 0 : index
    %c0_16 = arith.constant 0 : index
    %49 = vector.load %arg5[%c0_15, %c0_16] : memref<1x1xf32, #tpu.memory_space<vmem>>, vector<1x1xf32>
    %50 = vector.broadcast %49 : vector<1x1xf32> to vector<1x1024xf32>
    %51 = arith.addf %48, %50 : vector<1x1024xf32>
    %c0_17 = arith.constant 0 : index
    %c0_18 = arith.constant 0 : index
    %52 = vector.load %arg6[%c0_17, %c0_18] : memref<1x1024xf32, #tpu.memory_space<vmem>>, vector<1x1024xf32>
    tpu.vector_store %arg6[%c0_17, %c0_18], %51 {strides = array<i32>} : memref<1x1024xf32, #tpu.memory_space<vmem>>, vector<1x1024xf32>,
    return
  }
  func.func @transform_0(%arg0: i32) -> (i32, i32) {
    %c0_i32 = arith.constant 0 : i32
    %c0_i32_0 = arith.constant 0 : i32
    return %c0_i32, %arg0 : i32, i32
  }
  func.func @transform_1(%arg0: i32) -> (i32, i32) {
    %c0_i32 = arith.constant 0 : i32
    %c0_i32_0 = arith.constant 0 : i32
    %c0_i32_1 = arith.constant 0 : i32
    return %c0_i32, %c0_i32_0 : i32, i32
  }
  func.func @transform_2(%arg0: i32) -> (i32, i32) {
    %c0_i32 = arith.constant 0 : i32
    %c0_i32_0 = arith.constant 0 : i32
    %c0_i32_1 = arith.constant 0 : i32
    return %c0_i32, %c0_i32_0 : i32, i32
  }
  func.func @transform_3(%arg0: i32) -> (i32, i32) {
    %c0_i32 = arith.constant 0 : i32
    %c0_i32_0 = arith.constant 0 : i32
    %c0_i32_1 = arith.constant 0 : i32
    return %c0_i32, %c0_i32_0 : i32, i32
  }
  func.func @transform_4(%arg0: i32) -> (i32, i32) {
    %c0_i32 = arith.constant 0 : i32
    %c0_i32_0 = arith.constant 0 : i32
    %c0_i32_1 = arith.constant 0 : i32
    return %c0_i32, %c0_i32_0 : i32, i32
  }
  func.func @transform_5(%arg0: i32) -> (i32, i32) {
    %c0_i32 = arith.constant 0 : i32
    %c0_i32_0 = arith.constant 0 : i32
    return %c0_i32, %arg0 : i32, i32
  }
}

</mosaic_0001>

<llo_original>
// kernel: simple_nn_forward.1
$region0: #{simple_nn_forward.1}
  #allocation0 [shape = 'u32[]', space=smem, size = 0x4, offset = 0x4, fixed_abs, tag = 'smem constant byte address 0x4 - core index']
  #allocation1 [shape = 'u32[144,128]{1,0:T(1,128)}', space=vmem, size = 0x12000, scoped, tag = 'internal scratch']
  #allocation2 [shape = 'f32[1,1]{1,0:T(1,128)S(1)}', space=vmem, size = 0x200, scoped, tag = 'scoped memory for simple_nn_forward.1']
  %s0 = inlined_call_operand.vmem [shape: s32[2,2048], index: 0, kind: input, shape index: {}]
  %s1 = inlined_call_operand.vmem [shape: bf16[64,160], index: 1, kind: input, shape index: {}]
  %s2 = inlined_call_operand.vmem [shape: f32[64,1], index: 2, kind: input, shape index: {}]
  %s3 = inlined_call_operand.vmem [shape: f32[64,1], index: 3, kind: input, shape index: {}]
  %s4 = inlined_call_operand.<no memory space> [shape: f32[1,1], index: 4, kind: input, shape index: {}]
  %s5 = inlined_call_operand.hbm [shape: f32[1,2048], index: 5, kind: output, shape index: {}]
  %s6 = sld [smem:[#allocation0]]
  $region53: #{simple_nn_forward.1} parent=0
    _
  %s8 = ssub.s32 1, %s6
  %s9 = scalar_select 0, %s8, %s6
  %v10 = vstv %s4
  %11 = vst [vmem:[#allocation2] sm:$0x1] %v10
  $region1: #{simple_nn_forward.1} parent=0
    #allocation3 [shape = 'u8[8192]{0}', space=vmem, size = 0x2000, scoped, tag = 'output window, operand 0']
    #allocation4 [shape = 's32[2]{0}', space=sflag, size = 0x8, scoped, tag = 'scoped memory for simple_nn_forward.1']
    %12 = vsyncpa [#allocation4], 0
    %s13 = scalar_lea.sflag [#allocation4], 1
    %14 = vsyncpa %s13, 0
    loop: start=0, step=1, limit=4
    $region2: #{simple_nn_forward.1} parent=1 // loop_pre_header
      _
    $region3: #{simple_nn_forward.1} parent=1 // loop_header
      %s16 = sphi 0, %s20
      %p17 = scmp.ge.s32.totalorder %s16, 4
      %s26 = sphi 0, %s28
      %s29 = sphi 0, %s26
      %s30 = sphi 0, %s29
      %s46 = sphi 0, %s30
      %s50 = sphi 0, %s50
      %s52 = sphi 0, %s50
      %s53 = sphi 0, %s52
      %s67 = sphi 0, %s53
      %s71 = sphi 0, %s71
      %s73 = sphi 0, %s71
      %s74 = sphi 0, %s73
      %s88 = sphi 0, %s74
      %s92 = sphi 0, %s92
      %s94 = sphi 0, %s92
      %s95 = sphi 0, %s94
      %s109 = sphi 0, %s95
      %s113 = sphi 0, %s113
      %s115 = sphi 0, %s113
      %s116 = sphi 0, %s115
      %s130 = sphi 0, %s116
      %s136 = sphi 0, %s138
      %s139 = sphi 0, %s136
      %s140 = sphi 0, %s139
      %s156 = sphi 0, %s140
    $region4: #{simple_nn_forward.1} parent=1 // loop_header_branch
      %19 = sbr.rel (%p17) target = $region8
    $region5: #{simple_nn_forward.1} parent=1 // loop_body
      %s21 = ssub.s32 %s16, 1
      %s22 = ssub.s32 %s16, 2
      %s23 = sadd.s32 %s16, 1
      %s24 = ssub.s32 %s16, %s23
      %p25 = scmp.eq.s32.totalorder %s24, 0
      %s27 = sadd.s32 %s26, 1
      %s28 = scalar_select %p25, %s26, %s27
      %p31 = pneg %p25
      %p32 = scmp.eq.s32.totalorder %s16, 1
      %p33 = por %p31, %p32
      %p34 = scmp.ne.s32.totalorder %s26, %s29
      %p35 = scmp.eq.s32.totalorder %s16, 0
      %p36 = por %p34, %p35
      %p37 = scmp.ne.s32.totalorder %s26, %s29
      %p38 = scmp.eq.s32.totalorder %s21, 1
      %p39 = por %p37, %p38
      %p40 = scmp.ne.s32.totalorder %s29, %s30
      %p41 = scmp.eq.s32.totalorder %s21, 0
      %p42 = por %p40, %p41
      %p43 = scmp.ne.s32.totalorder %s29, %s30
      %p44 = scmp.eq.s32.totalorder %s22, 1
      %p45 = por %p43, %p44
      %p47 = scmp.ne.s32.totalorder %s30, %s46
      %p48 = scmp.eq.s32.totalorder %s22, 0
      %p49 = por %p47, %p48
      %s51 = sadd.s32 %s50, 1
      %p54 = scmp.eq.s32.totalorder %s16, 1
      %p55 = scmp.ne.s32.totalorder %s50, %s52
      %p56 = scmp.eq.s32.totalorder %s16, 0
      %p57 = por %p55, %p56
      %p58 = scmp.ne.s32.totalorder %s50, %s52
      %p59 = scmp.eq.s32.totalorder %s21, 1
      %p60 = por %p58, %p59
      %p61 = scmp.ne.s32.totalorder %s52, %s53
      %p62 = scmp.eq.s32.totalorder %s21, 0
      %p63 = por %p61, %p62
      %p64 = scmp.ne.s32.totalorder %s52, %s53
      %p65 = scmp.eq.s32.totalorder %s22, 1
      %p66 = por %p64, %p65
      %p68 = scmp.ne.s32.totalorder %s53, %s67
      %p69 = scmp.eq.s32.totalorder %s22, 0
      %p70 = por %p68, %p69
      %s72 = sadd.s32 %s71, 1
      %p75 = scmp.eq.s32.totalorder %s16, 1
      %p76 = scmp.ne.s32.totalorder %s71, %s73
      %p77 = scmp.eq.s32.totalorder %s16, 0
      %p78 = por %p76, %p77
      %p79 = scmp.ne.s32.totalorder %s71, %s73
      %p80 = scmp.eq.s32.totalorder %s21, 1
      %p81 = por %p79, %p80
      %p82 = scmp.ne.s32.totalorder %s73, %s74
      %p83 = scmp.eq.s32.totalorder %s21, 0
      %p84 = por %p82, %p83
      %p85 = scmp.ne.s32.totalorder %s73, %s74
      %p86 = scmp.eq.s32.totalorder %s22, 1
      %p87 = por %p85, %p86
      %p89 = scmp.ne.s32.totalorder %s74, %s88
      %p90 = scmp.eq.s32.totalorder %s22, 0
      %p91 = por %p89, %p90
      %s93 = sadd.s32 %s92, 1
      %p96 = scmp.eq.s32.totalorder %s16, 1
      %p97 = scmp.ne.s32.totalorder %s92, %s94
      %p98 = scmp.eq.s32.totalorder %s16, 0
      %p99 = por %p97, %p98
      %p100 = scmp.ne.s32.totalorder %s92, %s94
      %p101 = scmp.eq.s32.totalorder %s21, 1
      %p102 = por %p100, %p101
      %p103 = scmp.ne.s32.totalorder %s94, %s95
      %p104 = scmp.eq.s32.totalorder %s21, 0
      %p105 = por %p103, %p104
      %p106 = scmp.ne.s32.totalorder %s94, %s95
      %p107 = scmp.eq.s32.totalorder %s22, 1
      %p108 = por %p106, %p107
      %p110 = scmp.ne.s32.totalorder %s95, %s109
      %p111 = scmp.eq.s32.totalorder %s22, 0
      %p112 = por %p110, %p111
      %s114 = sadd.s32 %s113, 1
      %p117 = scmp.eq.s32.totalorder %s16, 1
      %p118 = scmp.ne.s32.totalorder %s113, %s115
      %p119 = scmp.eq.s32.totalorder %s16, 0
      %p120 = por %p118, %p119
      %p121 = scmp.ne.s32.totalorder %s113, %s115
      %p122 = scmp.eq.s32.totalorder %s21, 1
      %p123 = por %p121, %p122
      %p124 = scmp.ne.s32.totalorder %s115, %s116
      %p125 = scmp.eq.s32.totalorder %s21, 0
      %p126 = por %p124, %p125
      %p127 = scmp.ne.s32.totalorder %s115, %s116
      %p128 = scmp.eq.s32.totalorder %s22, 1
      %p129 = por %p127, %p128
      %p131 = scmp.ne.s32.totalorder %s116, %s130
      %p132 = scmp.eq.s32.totalorder %s22, 0
      %p133 = por %p131, %p132
      %s134 = ssub.s32 %s16, %s23
      %p135 = scmp.eq.s32.totalorder %s134, 0
      %s137 = sadd.s32 %s136, 1
      %s138 = scalar_select %p135, %s136, %s137
      %p141 = pneg %p135
      %p142 = scmp.eq.s32.totalorder %s16, 1
      %p143 = por %p141, %p142
      %p144 = scmp.ne.s32.totalorder %s136, %s139
      %p145 = scmp.eq.s32.totalorder %s16, 0
      %p146 = por %p144, %p145
      %p147 = scmp.ne.s32.totalorder %s136, %s139
      %p148 = scmp.eq.s32.totalorder %s21, 1
      %p149 = por %p147, %p148
      %p150 = scmp.ne.s32.totalorder %s139, %s140
      %p151 = scmp.eq.s32.totalorder %s21, 0
      %p152 = por %p150, %p151
      %p153 = scmp.ne.s32.totalorder %s139, %s140
      %p154 = scmp.eq.s32.totalorder %s22, 1
      %p155 = por %p153, %p154
      %p157 = scmp.ne.s32.totalorder %s140, %s156
      %p158 = scmp.eq.s32.totalorder %s22, 0
      %p159 = por %p157, %p158
      %p160 = scmp.le.s32.totalorder 1, %s16
      %p161 = scmp.lt.s32.totalorder %s16, 3
      %p162 = pnand %p160, %p161
      %p163 = pneg %p162
      // Predicated region
      $region9: #{simple_nn_forward.1} parent=5 // pred_check
        _
      $region10: #{simple_nn_forward.1} parent=5 // pred_check_branch
        %165 = sbr.rel (%p162) target = $region12
      $region11: #{simple_nn_forward.1} parent=5 // pred_region
        %s166 = ssub.s32 %s16, 1
        // Predicated region
        $region13: #{simple_nn_forward.1} parent=11 // pred_check
          %p167 = pneg %p63
        $region14: #{simple_nn_forward.1} parent=11 // pred_check_branch
          %169 = sbr.rel (%p167) target = $region16
        $region15: #{simple_nn_forward.1} parent=11 // pred_region
          _
        $region16: #{simple_nn_forward.1} parent=11 // pred_fallthru
          _
        // Predicated region
        $region17: #{simple_nn_forward.1} parent=11 // pred_check
          %p170 = pneg %p84
        $region18: #{simple_nn_forward.1} parent=11 // pred_check_branch
          %172 = sbr.rel (%p170) target = $region20
        $region19: #{simple_nn_forward.1} parent=11 // pred_region
          _
        $region20: #{simple_nn_forward.1} parent=11 // pred_fallthru
          _
        // Predicated region
        $region21: #{simple_nn_forward.1} parent=11 // pred_check
          %p173 = pneg %p105
        $region22: #{simple_nn_forward.1} parent=11 // pred_check_branch
          %175 = sbr.rel (%p173) target = $region24
        $region23: #{simple_nn_forward.1} parent=11 // pred_region
          _
        $region24: #{simple_nn_forward.1} parent=11 // pred_fallthru
          _
        // Predicated region
        $region25: #{simple_nn_forward.1} parent=11 // pred_check
          %p176 = pneg %p126
        $region26: #{simple_nn_forward.1} parent=11 // pred_check_branch
          %178 = sbr.rel (%p176) target = $region28
        $region27: #{simple_nn_forward.1} parent=11 // pred_region
          _
        $region28: #{simple_nn_forward.1} parent=11 // pred_fallthru
          _
      $region12: #{simple_nn_forward.1} parent=5 // pred_fallthru
        _
      %p179 = scmp.lt.s32.totalorder %s16, 2
      // Predicated region
      $region29: #{simple_nn_forward.1} parent=5 // pred_check
        %p180 = pneg %p179
      $region30: #{simple_nn_forward.1} parent=5 // pred_check_branch
        %182 = sbr.rel (%p180) target = $region32
      $region31: #{simple_nn_forward.1} parent=5 // pred_region
        // Predicated region
        $region33: #{simple_nn_forward.1} parent=31 // pred_check
          %p183 = pneg %p36
        $region34: #{simple_nn_forward.1} parent=31 // pred_check_branch
          %185 = sbr.rel (%p183) target = $region36
        $region35: #{simple_nn_forward.1} parent=31 // pred_region
          %s186 = smul.u32 8, %s16
          %p187 = scmp.lt.s32.totalorder %s186, 15
          %s188 = scalar_select %p187, %s186, 15
          %s189 = smul.addr %s188, 2
          %s190 = scalar_lea.vmem %s0, %s189
          %s191 = smul.u32 8, %s16
        $region36: #{simple_nn_forward.1} parent=31 // pred_fallthru
          _
      $region32: #{simple_nn_forward.1} parent=5 // pred_fallthru
        _
      %p192 = scmp.le.s32.totalorder 1, %s16
      %p193 = scmp.lt.s32.totalorder %s16, 3
      %p194 = pnand %p192, %p193
      %p195 = pneg %p194
      // Predicated region
      $region37: #{simple_nn_forward.1} parent=5 // pred_check
        _
      $region38: #{simple_nn_forward.1} parent=5 // pred_check_branch
        %197 = sbr.rel (%p194) target = $region40
      $region39: #{simple_nn_forward.1} parent=5 // pred_region
        %s198 = ssub.s32 %s16, 1
        %s199 = smul.u32 8, %s21
        %p200 = scmp.lt.s32.totalorder %s199, 15
        %s201 = scalar_select %p200, %s199, 15
        %s202 = smul.addr %s201, 2
        %s203 = scalar_lea.vmem %s0, %s202
        %p204 = pneg %p42
        %p205 = pneg %p39
        %p206 = pneg %p63
        %p207 = pneg %p60
        %p208 = pneg %p84
        %p209 = pneg %p81
        %p210 = pneg %p105
        %p211 = pneg %p102
        %p212 = pneg %p126
        %p213 = pneg %p123
        %p214 = pneg %p152
        %p215 = pneg %p149
        %s216 = sand.u32 %s139, 1
        %s217 = scalar_lea.sflag [#allocation4], %s216
        %s218 = sand.u32 %s139, 1
        %s219 = smul.addr %s218, 8
        %s220 = scalar_lea.vmem [#allocation3], %s219
        %s221 = smul.u32 8, %s21
        %p222 = scmp.lt.s32.totalorder %s221, 15
        %s223 = scalar_select %p222, %s221, 15
        %s224 = smul.addr %s223, 2
        %s225 = scalar_lea.vmem %s0, %s224
        %s226 = smul.u32 8, %s21
        %s227 = smul.u32 8, %s21
        %v229 = vld [vmem:[%s225] sm:$0xff]
        %v230 = vld [vmem:[%s225 + $0x8] sm:$0xff]
        %v231 = vmul.u32 %v229, 2
        %v232 = vmul.u32 %v230, 2
        %v233 = vadd.s32 %v231, 1
        %v234 = vadd.s32 %v232, 1
        %v235 = vmul.u32 %v229, 3
        %v236 = vmul.u32 %v230, 3
        %v237 = vadd.s32 %v235, 2
        %v238 = vadd.s32 %v236, 2
        %v239 = vlaneseq
        %v240 = vshrl.u32 %v239, 7
        %v241 = vsub.s32 0, %v240
        %v242 = vrot.slane %v229, %v241
        %v243 = vlaneseq
        %v244 = vshrl.u32 %v243, 7
        %v245 = vsub.s32 2, %v244
        %v246 = vrot.slane %v229, %v245
        %v247 = vlaneseq
        %v248 = vshrl.u32 %v247, 7
        %v249 = vsub.s32 4, %v248
        %v250 = vrot.slane %v229, %v249
        %v251 = vlaneseq
        %v252 = vshrl.u32 %v251, 7
        %v253 = vsub.s32 6, %v252
        %v254 = vrot.slane %v229, %v253
        %v255 = vlaneseq
        %v256 = vshrl.u32 %v255, 7
        %v257 = vsub.s32 0, %v256
        %v258 = vrot.slane %v230, %v257
        %v259 = vlaneseq
        %v260 = vshrl.u32 %v259, 7
        %v261 = vsub.s32 2, %v260
        %v262 = vrot.slane %v230, %v261
        %v263 = vlaneseq
        %v264 = vshrl.u32 %v263, 7
        %v265 = vsub.s32 4, %v264
        %v266 = vrot.slane %v230, %v265
        %v267 = vlaneseq
        %v268 = vshrl.u32 %v267, 7
        %v269 = vsub.s32 6, %v268
        %v270 = vrot.slane %v230, %v269
        %v271 = vlaneseq
        %v272 = vshrl.u32 %v271, 7
        %v273 = vsub.s32 0, %v272
        %v274 = vrot.slane %v233, %v273
        %v275 = vlaneseq
        %v276 = vshrl.u32 %v275, 7
        %v277 = vsub.s32 2, %v276
        %v278 = vrot.slane %v233, %v277
        %v279 = vlaneseq
        %v280 = vshrl.u32 %v279, 7
        %v281 = vsub.s32 4, %v280
        %v282 = vrot.slane %v233, %v281
        %v283 = vlaneseq
        %v284 = vshrl.u32 %v283, 7
        %v285 = vsub.s32 6, %v284
        %v286 = vrot.slane %v233, %v285
        %v287 = vlaneseq
        %v288 = vshrl.u32 %v287, 7
        %v289 = vsub.s32 0, %v288
        %v290 = vrot.slane %v234, %v289
        %v291 = vlaneseq
        %v292 = vshrl.u32 %v291, 7
        %v293 = vsub.s32 2, %v292
        %v294 = vrot.slane %v234, %v293
        %v295 = vlaneseq
        %v296 = vshrl.u32 %v295, 7
        %v297 = vsub.s32 4, %v296
        %v298 = vrot.slane %v234, %v297
        %v299 = vlaneseq
        %v300 = vshrl.u32 %v299, 7
        %v301 = vsub.s32 6, %v300
        %v302 = vrot.slane %v234, %v301
        %v303 = vlaneseq
        %v304 = vshrl.u32 %v303, 7
        %v305 = vsub.s32 1, %v304
        %v306 = vrot.slane %v229, %v305
        %v307 = vlaneseq
        %v308 = vshrl.u32 %v307, 7
        %v309 = vsub.s32 3, %v308
        %v310 = vrot.slane %v229, %v309
        %v311 = vlaneseq
        %v312 = vshrl.u32 %v311, 7
        %v313 = vsub.s32 5, %v312
        %v314 = vrot.slane %v229, %v313
        %v315 = vlaneseq
        %v316 = vshrl.u32 %v315, 7
        %v317 = vsub.s32 7, %v316
        %v318 = vrot.slane %v229, %v317
        %v319 = vlaneseq
        %v320 = vshrl.u32 %v319, 7
        %v321 = vsub.s32 1, %v320
        %v322 = vrot.slane %v230, %v321
        %v323 = vlaneseq
        %v324 = vshrl.u32 %v323, 7
        %v325 = vsub.s32 3, %v324
        %v326 = vrot.slane %v230, %v325
        %v327 = vlaneseq
        %v328 = vshrl.u32 %v327, 7
        %v329 = vsub.s32 5, %v328
        %v330 = vrot.slane %v230, %v329
        %v331 = vlaneseq
        %v332 = vshrl.u32 %v331, 7
        %v333 = vsub.s32 7, %v332
        %v334 = vrot.slane %v230, %v333
        %v335 = vlaneseq
        %v336 = vshrl.u32 %v335, 7
        %v337 = vsub.s32 1, %v336
        %v338 = vrot.slane %v233, %v337
        %v339 = vlaneseq
        %v340 = vshrl.u32 %v339, 7
        %v341 = vsub.s32 3, %v340
        %v342 = vrot.slane %v233, %v341
        %v343 = vlaneseq
        %v344 = vshrl.u32 %v343, 7
        %v345 = vsub.s32 5, %v344
        %v346 = vrot.slane %v233, %v345
        %v347 = vlaneseq
        %v348 = vshrl.u32 %v347, 7
        %v349 = vsub.s32 7, %v348
        %v350 = vrot.slane %v233, %v349
        %v351 = vlaneseq
        %v352 = vshrl.u32 %v351, 7
        %v353 = vsub.s32 1, %v352
        %v354 = vrot.slane %v234, %v353
        %v355 = vlaneseq
        %v356 = vshrl.u32 %v355, 7
        %v357 = vsub.s32 3, %v356
        %v358 = vrot.slane %v234, %v357
        %v359 = vlaneseq
        %v360 = vshrl.u32 %v359, 7
        %v361 = vsub.s32 5, %v360
        %v362 = vrot.slane %v234, %v361
        %v363 = vlaneseq
        %v364 = vshrl.u32 %v363, 7
        %v365 = vsub.s32 7, %v364
        %v366 = vrot.slane %v234, %v365
        %v367 = vlaneseq
        %v368 = vshrl.u32 %v367, 7
        %v369 = vsub.s32 1, %v368
        %v370 = vrot.slane %v237, %v369
        %v371 = vlaneseq
        %v372 = vshrl.u32 %v371, 7
        %v373 = vsub.s32 3, %v372
        %v374 = vrot.slane %v237, %v373
        %v375 = vlaneseq
        %v376 = vshrl.u32 %v375, 7
        %v377 = vsub.s32 5, %v376
        %v378 = vrot.slane %v237, %v377
        %v379 = vlaneseq
        %v380 = vshrl.u32 %v379, 7
        %v381 = vsub.s32 7, %v380
        %v382 = vrot.slane %v237, %v381
        %v383 = vlaneseq
        %v384 = vshrl.u32 %v383, 7
        %v385 = vsub.s32 1, %v384
        %v386 = vrot.slane %v238, %v385
        %v387 = vlaneseq
        %v388 = vshrl.u32 %v387, 7
        %v389 = vsub.s32 3, %v388
        %v390 = vrot.slane %v238, %v389
        %v391 = vlaneseq
        %v392 = vshrl.u32 %v391, 7
        %v393 = vsub.s32 5, %v392
        %v394 = vrot.slane %v238, %v393
        %v395 = vlaneseq
        %v396 = vshrl.u32 %v395, 7
        %v397 = vsub.s32 7, %v396
        %v398 = vrot.slane %v238, %v397
        %vm399 = vcmask 1040384
        %v400 = vsel %vm399, %v242, %v274
        %v401 = vsel %vm399, %v246, %v278
        %v402 = vsel %vm399, %v250, %v282
        %v403 = vsel %vm399, %v254, %v286
        %v404 = vsel %vm399, %v258, %v290
        %v405 = vsel %vm399, %v262, %v294
        %v406 = vsel %vm399, %v266, %v298
        %v407 = vsel %vm399, %v270, %v302
        %vm408 = vcmask 1041408
        %v409 = vsel %vm408, %v400, %v306
        %v410 = vsel %vm408, %v401, %v310
        %v411 = vsel %vm408, %v402, %v314
        %v412 = vsel %vm408, %v403, %v318
        %v413 = vsel %vm408, %v404, %v322
        %v414 = vsel %vm408, %v405, %v326
        %v415 = vsel %vm408, %v406, %v330
        %v416 = vsel %vm408, %v407, %v334
        %vm417 = vcmask 1042432
        %v418 = vsel %vm417, %v409, %v338
        %v419 = vsel %vm417, %v410, %v342
        %v420 = vsel %vm417, %v411, %v346
        %v421 = vsel %vm417, %v412, %v350
        %v422 = vsel %vm417, %v413, %v354
        %v423 = vsel %vm417, %v414, %v358
        %v424 = vsel %vm417, %v415, %v362
        %v425 = vsel %vm417, %v416, %v366
        %vm426 = vcmask 1043456
        %v427 = vsel %vm426, %v418, %v370
        %v428 = vsel %vm426, %v419, %v374
        %v429 = vsel %vm426, %v420, %v378
        %v430 = vsel %vm426, %v421, %v382
        %v431 = vsel %vm426, %v422, %v386
        %v432 = vsel %vm426, %v423, %v390
        %v433 = vsel %vm426, %v424, %v394
        %v434 = vsel %vm426, %v425, %v398
        %v435 = vand.u32 %v427, 31
        %v436 = vand.u32 %v428, 31
        %v437 = vand.u32 %v429, 31
        %v438 = vand.u32 %v430, 31
        %v439 = vand.u32 %v431, 31
        %v440 = vand.u32 %v432, 31
        %v441 = vand.u32 %v433, 31
        %v442 = vand.u32 %v434, 31
        %v443 = vlaneseq
        %v444 = vshrl.u32 %v443, 7
        %v445 = vadd.s32 %v444, 8
        %v446 = vadd.s32 %v444, 16
        %v447 = vadd.s32 %v444, 24
        %v448 = vcombine.low %v435, %v436
        %v449 = vcombine.high %v435, %v436
        %v450 = vcombine.low %v437, %v438
        %v451 = vcombine.high %v437, %v438
        %v452 = vcombine.low %v439, %v440
        %v453 = vcombine.high %v439, %v440
        %v454 = vcombine.low %v441, %v442
        %v455 = vcombine.high %v441, %v442
        %v457 = vunpack.c.l.s4 1966171168
        %v458 = vunpack.c.0.s8 %v457
        %v459 = vlaneseq
        %v460 = vshrl.u32 %v459, 7
        %v461 = vsub.s32 %v458, %v460
        %v462 = vrot.slane %v448, %v461
        %v464 = vunpack.c.l.s4 1966171168
        %v465 = vunpack.c.0.s8 %v464
        %v466 = vlaneseq
        %v467 = vshrl.u32 %v466, 7
        %v468 = vsub.s32 %v465, %v467
        %v469 = vrot.slane %v449, %v468
        %v471 = vunpack.c.l.s4 1966171168
        %v472 = vunpack.c.0.s8 %v471
        %v473 = vlaneseq
        %v474 = vshrl.u32 %v473, 7
        %v475 = vsub.s32 %v472, %v474
        %v476 = vrot.slane %v450, %v475
        %v478 = vunpack.c.l.s4 1966171168
        %v479 = vunpack.c.0.s8 %v478
        %v480 = vlaneseq
        %v481 = vshrl.u32 %v480, 7
        %v482 = vsub.s32 %v479, %v481
        %v483 = vrot.slane %v451, %v482
        %v485 = vunpack.c.l.s4 1966171168
        %v486 = vunpack.c.0.s8 %v485
        %v487 = vlaneseq
        %v488 = vshrl.u32 %v487, 7
        %v489 = vsub.s32 %v486, %v488
        %v490 = vrot.slane %v452, %v489
        %v492 = vunpack.c.l.s4 1966171168
        %v493 = vunpack.c.0.s8 %v492
        %v494 = vlaneseq
        %v495 = vshrl.u32 %v494, 7
        %v496 = vsub.s32 %v493, %v495
        %v497 = vrot.slane %v453, %v496
        %v499 = vunpack.c.l.s4 1966171168
        %v500 = vunpack.c.0.s8 %v499
        %v501 = vlaneseq
        %v502 = vshrl.u32 %v501, 7
        %v503 = vsub.s32 %v500, %v502
        %v504 = vrot.slane %v454, %v503
        %v506 = vunpack.c.l.s4 1966171168
        %v507 = vunpack.c.0.s8 %v506
        %v508 = vlaneseq
        %v509 = vshrl.u32 %v508, 7
        %v510 = vsub.s32 %v507, %v509
        %v511 = vrot.slane %v455, %v510
        %v512 = vcombine.low %v462, %v476
        %v513 = vcombine.high %v462, %v476
        %v514 = vcombine.low %v469, %v483
        %v515 = vcombine.low %v490, %v504
        %v516 = vcombine.high %v490, %v504
        %v517 = vcombine.low %v497, %v511
        %v519 = vunpack.c.l.s4 1966171168
        %v520 = vunpack.c.0.s8 %v519
        %v521 = vlaneseq
        %v522 = vshrl.u32 %v521, 7
        %v523 = vsub.s32 %v520, %v522
        %v524 = vrot.slane %v512, %v523
        %v526 = vunpack.c.l.s4 1966171168
        %v527 = vunpack.c.0.s8 %v526
        %v528 = vlaneseq
        %v529 = vshrl.u32 %v528, 7
        %v530 = vsub.s32 %v527, %v529
        %v531 = vrot.slane %v514, %v530
        %v533 = vunpack.c.l.s4 1966171168
        %v534 = vunpack.c.0.s8 %v533
        %v535 = vlaneseq
        %v536 = vshrl.u32 %v535, 7
        %v537 = vsub.s32 %v534, %v536
        %v538 = vrot.slane %v513, %v537
        %v540 = vunpack.c.l.s4 1966171168
        %v541 = vunpack.c.0.s8 %v540
        %v542 = vlaneseq
        %v543 = vshrl.u32 %v542, 7
        %v544 = vsub.s32 %v541, %v543
        %v545 = vrot.slane %v515, %v544
        %v547 = vunpack.c.l.s4 1966171168
        %v548 = vunpack.c.0.s8 %v547
        %v549 = vlaneseq
        %v550 = vshrl.u32 %v549, 7
        %v551 = vsub.s32 %v548, %v550
        %v552 = vrot.slane %v517, %v551
        %v554 = vunpack.c.l.s4 1966171168
        %v555 = vunpack.c.0.s8 %v554
        %v556 = vlaneseq
        %v557 = vshrl.u32 %v556, 7
        %v558 = vsub.s32 %v555, %v557
        %v559 = vrot.slane %v516, %v558
        %v560 = vcombine.low %v524, %v545
        %v561 = vcombine.high %v524, %v545
        %v562 = vcombine.low %v531, %v552
        %v563 = vcombine.low %v538, %v559
        %v564 = vcombine.high %v538, %v559
        %v565 = vlaneseq
        %v566 = vshrl.u32 %v565, 7
        %v567 = vsub.s32 0, %v566
        %v568 = vrot.slane %v560, %v567
        %v569 = vlaneseq
        %v570 = vshrl.u32 %v569, 7
        %v571 = vsub.s32 1, %v570
        %v572 = vrot.slane %v560, %v571
        %v573 = vlaneseq
        %v574 = vshrl.u32 %v573, 7
        %v575 = vsub.s32 2, %v574
        %v576 = vrot.slane %v560, %v575
        %v577 = vlaneseq
        %v578 = vshrl.u32 %v577, 7
        %v579 = vsub.s32 3, %v578
        %v580 = vrot.slane %v560, %v579
        %v581 = vlaneseq
        %v582 = vshrl.u32 %v581, 7
        %v583 = vsub.s32 4, %v582
        %v584 = vrot.slane %v560, %v583
        %v585 = vlaneseq
        %v586 = vshrl.u32 %v585, 7
        %v587 = vsub.s32 5, %v586
        %v588 = vrot.slane %v560, %v587
        %v589 = vlaneseq
        %v590 = vshrl.u32 %v589, 7
        %v591 = vsub.s32 6, %v590
        %v592 = vrot.slane %v560, %v591
        %v593 = vlaneseq
        %v594 = vshrl.u32 %v593, 7
        %v595 = vsub.s32 7, %v594
        %v596 = vrot.slane %v560, %v595
        %v597 = vlaneseq
        %v598 = vshrl.u32 %v597, 7
        %v599 = vsub.s32 0, %v598
        %v600 = vrot.slane %v563, %v599
        %v601 = vlaneseq
        %v602 = vshrl.u32 %v601, 7
        %v603 = vsub.s32 1, %v602
        %v604 = vrot.slane %v563, %v603
        %v605 = vlaneseq
        %v606 = vshrl.u32 %v605, 7
        %v607 = vsub.s32 2, %v606
        %v608 = vrot.slane %v563, %v607
        %v609 = vlaneseq
        %v610 = vshrl.u32 %v609, 7
        %v611 = vsub.s32 3, %v610
        %v612 = vrot.slane %v563, %v611
        %v613 = vlaneseq
        %v614 = vshrl.u32 %v613, 7
        %v615 = vsub.s32 4, %v614
        %v616 = vrot.slane %v563, %v615
        %v617 = vlaneseq
        %v618 = vshrl.u32 %v617, 7
        %v619 = vsub.s32 5, %v618
        %v620 = vrot.slane %v563, %v619
        %v621 = vlaneseq
        %v622 = vshrl.u32 %v621, 7
        %v623 = vsub.s32 6, %v622
        %v624 = vrot.slane %v563, %v623
        %v625 = vlaneseq
        %v626 = vshrl.u32 %v625, 7
        %v627 = vsub.s32 7, %v626
        %v628 = vrot.slane %v563, %v627
        %v629 = vlaneseq
        %v630 = vshrl.u32 %v629, 7
        %v631 = vsub.s32 0, %v630
        %v632 = vrot.slane %v561, %v631
        %v633 = vlaneseq
        %v634 = vshrl.u32 %v633, 7
        %v635 = vsub.s32 1, %v634
        %v636 = vrot.slane %v561, %v635
        %v637 = vlaneseq
        %v638 = vshrl.u32 %v637, 7
        %v639 = vsub.s32 2, %v638
        %v640 = vrot.slane %v561, %v639
        %v641 = vlaneseq
        %v642 = vshrl.u32 %v641, 7
        %v643 = vsub.s32 3, %v642
        %v644 = vrot.slane %v561, %v643
        %v645 = vlaneseq
        %v646 = vshrl.u32 %v645, 7
        %v647 = vsub.s32 4, %v646
        %v648 = vrot.slane %v561, %v647
        %v649 = vlaneseq
        %v650 = vshrl.u32 %v649, 7
        %v651 = vsub.s32 5, %v650
        %v652 = vrot.slane %v561, %v651
        %v653 = vlaneseq
        %v654 = vshrl.u32 %v653, 7
        %v655 = vsub.s32 6, %v654
        %v656 = vrot.slane %v561, %v655
        %v657 = vlaneseq
        %v658 = vshrl.u32 %v657, 7
        %v659 = vsub.s32 7, %v658
        %v660 = vrot.slane %v561, %v659
        %v661 = vlaneseq
        %v662 = vshrl.u32 %v661, 7
        %v663 = vsub.s32 0, %v662
        %v664 = vrot.slane %v564, %v663
        %v665 = vlaneseq
        %v666 = vshrl.u32 %v665, 7
        %v667 = vsub.s32 1, %v666
        %v668 = vrot.slane %v564, %v667
        %v669 = vlaneseq
        %v670 = vshrl.u32 %v669, 7
        %v671 = vsub.s32 2, %v670
        %v672 = vrot.slane %v564, %v671
        %v673 = vlaneseq
        %v674 = vshrl.u32 %v673, 7
        %v675 = vsub.s32 3, %v674
        %v676 = vrot.slane %v564, %v675
        %v677 = vlaneseq
        %v678 = vshrl.u32 %v677, 7
        %v679 = vsub.s32 4, %v678
        %v680 = vrot.slane %v564, %v679
        %v681 = vlaneseq
        %v682 = vshrl.u32 %v681, 7
        %v683 = vsub.s32 5, %v682
        %v684 = vrot.slane %v564, %v683
        %v685 = vlaneseq
        %v686 = vshrl.u32 %v685, 7
        %v687 = vsub.s32 6, %v686
        %v688 = vrot.slane %v564, %v687
        %v689 = vlaneseq
        %v690 = vshrl.u32 %v689, 7
        %v691 = vsub.s32 7, %v690
        %v692 = vrot.slane %v564, %v691
        %v693 = vlaneseq
        %v694 = vshrl.u32 %v693, 7
        %v695 = vsub.s32 0, %v694
        %v696 = vrot.slane %v562, %v695
        %v697 = vlaneseq
        %v698 = vshrl.u32 %v697, 7
        %v699 = vsub.s32 1, %v698
        %v700 = vrot.slane %v562, %v699
        %v701 = vlaneseq
        %v702 = vshrl.u32 %v701, 7
        %v703 = vsub.s32 2, %v702
        %v704 = vrot.slane %v562, %v703
        %v705 = vlaneseq
        %v706 = vshrl.u32 %v705, 7
        %v707 = vsub.s32 3, %v706
        %v708 = vrot.slane %v562, %v707
        %v709 = vlaneseq
        %v710 = vshrl.u32 %v709, 7
        %v711 = vsub.s32 4, %v710
        %v712 = vrot.slane %v562, %v711
        %v713 = vlaneseq
        %v714 = vshrl.u32 %v713, 7
        %v715 = vsub.s32 5, %v714
        %v716 = vrot.slane %v562, %v715
        %v717 = vlaneseq
        %v718 = vshrl.u32 %v717, 7
        %v719 = vsub.s32 6, %v718
        %v720 = vrot.slane %v562, %v719
        %v721 = vlaneseq
        %v722 = vshrl.u32 %v721, 7
        %v723 = vsub.s32 7, %v722
        %v724 = vrot.slane %v562, %v723
        %vm725 = vcmp.eq.s32.totalorder %v444, %v568
        %vm726 = vcmp.eq.s32.totalorder %v444, %v572
        %vm727 = vcmp.eq.s32.totalorder %v444, %v576
        %vm728 = vcmp.eq.s32.totalorder %v444, %v580
        %vm729 = vcmp.eq.s32.totalorder %v444, %v584
        %vm730 = vcmp.eq.s32.totalorder %v444, %v588
        %vm731 = vcmp.eq.s32.totalorder %v444, %v592
        %vm732 = vcmp.eq.s32.totalorder %v444, %v596
        %vm733 = vcmp.eq.s32.totalorder %v445, %v568
        %vm734 = vcmp.eq.s32.totalorder %v445, %v572
        %vm735 = vcmp.eq.s32.totalorder %v445, %v576
        %vm736 = vcmp.eq.s32.totalorder %v445, %v580
        %vm737 = vcmp.eq.s32.totalorder %v445, %v584
        %vm738 = vcmp.eq.s32.totalorder %v445, %v588
        %vm739 = vcmp.eq.s32.totalorder %v445, %v592
        %vm740 = vcmp.eq.s32.totalorder %v445, %v596
        %vm741 = vcmp.eq.s32.totalorder %v446, %v568
        %vm742 = vcmp.eq.s32.totalorder %v446, %v572
        %vm743 = vcmp.eq.s32.totalorder %v446, %v576
        %vm744 = vcmp.eq.s32.totalorder %v446, %v580
        %vm745 = vcmp.eq.s32.totalorder %v446, %v584
        %vm746 = vcmp.eq.s32.totalorder %v446, %v588
        %vm747 = vcmp.eq.s32.totalorder %v446, %v592
        %vm748 = vcmp.eq.s32.totalorder %v446, %v596
        %vm749 = vcmp.eq.s32.totalorder %v447, %v568
        %vm750 = vcmp.eq.s32.totalorder %v447, %v572
        %vm751 = vcmp.eq.s32.totalorder %v447, %v576
        %vm752 = vcmp.eq.s32.totalorder %v447, %v580
        %vm753 = vcmp.eq.s32.totalorder %v447, %v584
        %vm754 = vcmp.eq.s32.totalorder %v447, %v588
        %vm755 = vcmp.eq.s32.totalorder %v447, %v592
        %vm756 = vcmp.eq.s32.totalorder %v447, %v596
        %vm757 = vcmp.eq.s32.totalorder %v444, %v600
        %vm758 = vcmp.eq.s32.totalorder %v444, %v604
        %vm759 = vcmp.eq.s32.totalorder %v444, %v608
        %vm760 = vcmp.eq.s32.totalorder %v444, %v612
        %vm761 = vcmp.eq.s32.totalorder %v444, %v616
        %vm762 = vcmp.eq.s32.totalorder %v444, %v620
        %vm763 = vcmp.eq.s32.totalorder %v444, %v624
        %vm764 = vcmp.eq.s32.totalorder %v444, %v628
        %vm765 = vcmp.eq.s32.totalorder %v445, %v600
        %vm766 = vcmp.eq.s32.totalorder %v445, %v604
        %vm767 = vcmp.eq.s32.totalorder %v445, %v608
        %vm768 = vcmp.eq.s32.totalorder %v445, %v612
        %vm769 = vcmp.eq.s32.totalorder %v445, %v616
        %vm770 = vcmp.eq.s32.totalorder %v445, %v620
        %vm771 = vcmp.eq.s32.totalorder %v445, %v624
        %vm772 = vcmp.eq.s32.totalorder %v445, %v628
        %vm773 = vcmp.eq.s32.totalorder %v446, %v600
        %vm774 = vcmp.eq.s32.totalorder %v446, %v604
        %vm775 = vcmp.eq.s32.totalorder %v446, %v608
        %vm776 = vcmp.eq.s32.totalorder %v446, %v612
        %vm777 = vcmp.eq.s32.totalorder %v446, %v616
        %vm778 = vcmp.eq.s32.totalorder %v446, %v620
        %vm779 = vcmp.eq.s32.totalorder %v446, %v624
        %vm780 = vcmp.eq.s32.totalorder %v446, %v628
        %vm781 = vcmp.eq.s32.totalorder %v447, %v600
        %vm782 = vcmp.eq.s32.totalorder %v447, %v604
        %vm783 = vcmp.eq.s32.totalorder %v447, %v608
        %vm784 = vcmp.eq.s32.totalorder %v447, %v612
        %vm785 = vcmp.eq.s32.totalorder %v447, %v616
        %vm786 = vcmp.eq.s32.totalorder %v447, %v620
        %vm787 = vcmp.eq.s32.totalorder %v447, %v624
        %vm788 = vcmp.eq.s32.totalorder %v447, %v628
        %vm789 = vcmp.eq.s32.totalorder %v444, %v632
        %vm790 = vcmp.eq.s32.totalorder %v444, %v636
        %vm791 = vcmp.eq.s32.totalorder %v444, %v640
        %vm792 = vcmp.eq.s32.totalorder %v444, %v644
        %vm793 = vcmp.eq.s32.totalorder %v444, %v648
        %vm794 = vcmp.eq.s32.totalorder %v444, %v652
        %vm795 = vcmp.eq.s32.totalorder %v444, %v656
        %vm796 = vcmp.eq.s32.totalorder %v444, %v660
        %vm797 = vcmp.eq.s32.totalorder %v445, %v632
        %vm798 = vcmp.eq.s32.totalorder %v445, %v636
        %vm799 = vcmp.eq.s32.totalorder %v445, %v640
        %vm800 = vcmp.eq.s32.totalorder %v445, %v644
        %vm801 = vcmp.eq.s32.totalorder %v445, %v648
        %vm802 = vcmp.eq.s32.totalorder %v445, %v652
        %vm803 = vcmp.eq.s32.totalorder %v445, %v656
        %vm804 = vcmp.eq.s32.totalorder %v445, %v660
        %vm805 = vcmp.eq.s32.totalorder %v446, %v632
        %vm806 = vcmp.eq.s32.totalorder %v446, %v636
        %vm807 = vcmp.eq.s32.totalorder %v446, %v640
        %vm808 = vcmp.eq.s32.totalorder %v446, %v644
        %vm809 = vcmp.eq.s32.totalorder %v446, %v648
        %vm810 = vcmp.eq.s32.totalorder %v446, %v652
        %vm811 = vcmp.eq.s32.totalorder %v446, %v656
        %vm812 = vcmp.eq.s32.totalorder %v446, %v660
        %vm813 = vcmp.eq.s32.totalorder %v447, %v632
        %vm814 = vcmp.eq.s32.totalorder %v447, %v636
        %vm815 = vcmp.eq.s32.totalorder %v447, %v640
        %vm816 = vcmp.eq.s32.totalorder %v447, %v644
        %vm817 = vcmp.eq.s32.totalorder %v447, %v648
        %vm818 = vcmp.eq.s32.totalorder %v447, %v652
        %vm819 = vcmp.eq.s32.totalorder %v447, %v656
        %vm820 = vcmp.eq.s32.totalorder %v447, %v660
        %vm821 = vcmp.eq.s32.totalorder %v444, %v664
        %vm822 = vcmp.eq.s32.totalorder %v444, %v668
        %vm823 = vcmp.eq.s32.totalorder %v444, %v672
        %vm824 = vcmp.eq.s32.totalorder %v444, %v676
        %vm825 = vcmp.eq.s32.totalorder %v444, %v680
        %vm826 = vcmp.eq.s32.totalorder %v444, %v684
        %vm827 = vcmp.eq.s32.totalorder %v444, %v688
        %vm828 = vcmp.eq.s32.totalorder %v444, %v692
        %vm829 = vcmp.eq.s32.totalorder %v445, %v664
        %vm830 = vcmp.eq.s32.totalorder %v445, %v668
        %vm831 = vcmp.eq.s32.totalorder %v445, %v672
        %vm832 = vcmp.eq.s32.totalorder %v445, %v676
        %vm833 = vcmp.eq.s32.totalorder %v445, %v680
        %vm834 = vcmp.eq.s32.totalorder %v445, %v684
        %vm835 = vcmp.eq.s32.totalorder %v445, %v688
        %vm836 = vcmp.eq.s32.totalorder %v445, %v692
        %vm837 = vcmp.eq.s32.totalorder %v446, %v664
        %vm838 = vcmp.eq.s32.totalorder %v446, %v668
        %vm839 = vcmp.eq.s32.totalorder %v446, %v672
        %vm840 = vcmp.eq.s32.totalorder %v446, %v676
        %vm841 = vcmp.eq.s32.totalorder %v446, %v680
        %vm842 = vcmp.eq.s32.totalorder %v446, %v684
        %vm843 = vcmp.eq.s32.totalorder %v446, %v688
        %vm844 = vcmp.eq.s32.totalorder %v446, %v692
        %vm845 = vcmp.eq.s32.totalorder %v447, %v664
        %vm846 = vcmp.eq.s32.totalorder %v447, %v668
        %vm847 = vcmp.eq.s32.totalorder %v447, %v672
        %vm848 = vcmp.eq.s32.totalorder %v447, %v676
        %vm849 = vcmp.eq.s32.totalorder %v447, %v680
        %vm850 = vcmp.eq.s32.totalorder %v447, %v684
        %vm851 = vcmp.eq.s32.totalorder %v447, %v688
        %vm852 = vcmp.eq.s32.totalorder %v447, %v692
        %vm853 = vcmp.eq.s32.totalorder %v444, %v696
        %vm854 = vcmp.eq.s32.totalorder %v444, %v700
        %vm855 = vcmp.eq.s32.totalorder %v444, %v704
        %vm856 = vcmp.eq.s32.totalorder %v444, %v708
        %vm857 = vcmp.eq.s32.totalorder %v444, %v712
        %vm858 = vcmp.eq.s32.totalorder %v444, %v716
        %vm859 = vcmp.eq.s32.totalorder %v444, %v720
        %vm860 = vcmp.eq.s32.totalorder %v444, %v724
        %vm861 = vcmp.eq.s32.totalorder %v445, %v696
        %vm862 = vcmp.eq.s32.totalorder %v445, %v700
        %vm863 = vcmp.eq.s32.totalorder %v445, %v704
        %vm864 = vcmp.eq.s32.totalorder %v445, %v708
        %vm865 = vcmp.eq.s32.totalorder %v445, %v712
        %vm866 = vcmp.eq.s32.totalorder %v445, %v716
        %vm867 = vcmp.eq.s32.totalorder %v445, %v720
        %vm868 = vcmp.eq.s32.totalorder %v445, %v724
        %vm869 = vcmp.eq.s32.totalorder %v446, %v696
        %vm870 = vcmp.eq.s32.totalorder %v446, %v700
        %vm871 = vcmp.eq.s32.totalorder %v446, %v704
        %vm872 = vcmp.eq.s32.totalorder %v446, %v708
        %vm873 = vcmp.eq.s32.totalorder %v446, %v712
        %vm874 = vcmp.eq.s32.totalorder %v446, %v716
        %vm875 = vcmp.eq.s32.totalorder %v446, %v720
        %vm876 = vcmp.eq.s32.totalorder %v446, %v724
        %vm877 = vcmp.eq.s32.totalorder %v447, %v696
        %vm878 = vcmp.eq.s32.totalorder %v447, %v700
        %vm879 = vcmp.eq.s32.totalorder %v447, %v704
        %vm880 = vcmp.eq.s32.totalorder %v447, %v708
        %vm881 = vcmp.eq.s32.totalorder %v447, %v712
        %vm882 = vcmp.eq.s32.totalorder %v447, %v716
        %vm883 = vcmp.eq.s32.totalorder %v447, %v720
        %vm884 = vcmp.eq.s32.totalorder %v447, %v724
        %v885 = vsel %vm725, 1, 0
        %v886 = vsel %vm726, 1, 0
        %v887 = vsel %vm727, 1, 0
        %v888 = vsel %vm728, 1, 0
        %v889 = vsel %vm729, 1, 0
        %v890 = vsel %vm730, 1, 0
        %v891 = vsel %vm731, 1, 0
        %v892 = vsel %vm732, 1, 0
        %v893 = vsel %vm733, 1, 0
        %v894 = vsel %vm734, 1, 0
        %v895 = vsel %vm735, 1, 0
        %v896 = vsel %vm736, 1, 0
        %v897 = vsel %vm737, 1, 0
        %v898 = vsel %vm738, 1, 0
        %v899 = vsel %vm739, 1, 0
        %v900 = vsel %vm740, 1, 0
        %v901 = vsel %vm741, 1, 0
        %v902 = vsel %vm742, 1, 0
        %v903 = vsel %vm743, 1, 0
        %v904 = vsel %vm744, 1, 0
        %v905 = vsel %vm745, 1, 0
        %v906 = vsel %vm746, 1, 0
        %v907 = vsel %vm747, 1, 0
        %v908 = vsel %vm748, 1, 0
        %v909 = vsel %vm749, 1, 0
        %v910 = vsel %vm750, 1, 0
        %v911 = vsel %vm751, 1, 0
        %v912 = vsel %vm752, 1, 0
        %v913 = vsel %vm753, 1, 0
        %v914 = vsel %vm754, 1, 0
        %v915 = vsel %vm755, 1, 0
        %v916 = vsel %vm756, 1, 0
        %v917 = vsel %vm757, 1, 0
        %v918 = vsel %vm758, 1, 0
        %v919 = vsel %vm759, 1, 0
        %v920 = vsel %vm760, 1, 0
        %v921 = vsel %vm761, 1, 0
        %v922 = vsel %vm762, 1, 0
        %v923 = vsel %vm763, 1, 0
        %v924 = vsel %vm764, 1, 0
        %v925 = vsel %vm765, 1, 0
        %v926 = vsel %vm766, 1, 0
        %v927 = vsel %vm767, 1, 0
        %v928 = vsel %vm768, 1, 0
        %v929 = vsel %vm769, 1, 0
        %v930 = vsel %vm770, 1, 0
        %v931 = vsel %vm771, 1, 0
        %v932 = vsel %vm772, 1, 0
        %v933 = vsel %vm773, 1, 0
        %v934 = vsel %vm774, 1, 0
        %v935 = vsel %vm775, 1, 0
        %v936 = vsel %vm776, 1, 0
        %v937 = vsel %vm777, 1, 0
        %v938 = vsel %vm778, 1, 0
        %v939 = vsel %vm779, 1, 0
        %v940 = vsel %vm780, 1, 0
        %v941 = vsel %vm781, 1, 0
        %v942 = vsel %vm782, 1, 0
        %v943 = vsel %vm783, 1, 0
        %v944 = vsel %vm784, 1, 0
        %v945 = vsel %vm785, 1, 0
        %v946 = vsel %vm786, 1, 0
        %v947 = vsel %vm787, 1, 0
        %v948 = vsel %vm788, 1, 0
        %v949 = vsel %vm789, 1, 0
        %v950 = vsel %vm790, 1, 0
        %v951 = vsel %vm791, 1, 0
        %v952 = vsel %vm792, 1, 0
        %v953 = vsel %vm793, 1, 0
        %v954 = vsel %vm794, 1, 0
        %v955 = vsel %vm795, 1, 0
        %v956 = vsel %vm796, 1, 0
        %v957 = vsel %vm797, 1, 0
        %v958 = vsel %vm798, 1, 0
        %v959 = vsel %vm799, 1, 0
        %v960 = vsel %vm800, 1, 0
        %v961 = vsel %vm801, 1, 0
        %v962 = vsel %vm802, 1, 0
        %v963 = vsel %vm803, 1, 0
        %v964 = vsel %vm804, 1, 0
        %v965 = vsel %vm805, 1, 0
        %v966 = vsel %vm806, 1, 0
        %v967 = vsel %vm807, 1, 0
        %v968 = vsel %vm808, 1, 0
        %v969 = vsel %vm809, 1, 0
        %v970 = vsel %vm810, 1, 0
        %v971 = vsel %vm811, 1, 0
        %v972 = vsel %vm812, 1, 0
        %v973 = vsel %vm813, 1, 0
        %v974 = vsel %vm814, 1, 0
        %v975 = vsel %vm815, 1, 0
        %v976 = vsel %vm816, 1, 0
        %v977 = vsel %vm817, 1, 0
        %v978 = vsel %vm818, 1, 0
        %v979 = vsel %vm819, 1, 0
        %v980 = vsel %vm820, 1, 0
        %v981 = vsel %vm821, 1, 0
        %v982 = vsel %vm822, 1, 0
        %v983 = vsel %vm823, 1, 0
        %v984 = vsel %vm824, 1, 0
        %v985 = vsel %vm825, 1, 0
        %v986 = vsel %vm826, 1, 0
        %v987 = vsel %vm827, 1, 0
        %v988 = vsel %vm828, 1, 0
        %v989 = vsel %vm829, 1, 0
        %v990 = vsel %vm830, 1, 0
        %v991 = vsel %vm831, 1, 0
        %v992 = vsel %vm832, 1, 0
        %v993 = vsel %vm833, 1, 0
        %v994 = vsel %vm834, 1, 0
        %v995 = vsel %vm835, 1, 0
        %v996 = vsel %vm836, 1, 0
        %v997 = vsel %vm837, 1, 0
        %v998 = vsel %vm838, 1, 0
        %v999 = vsel %vm839, 1, 0
        %v1000 = vsel %vm840, 1, 0
        %v1001 = vsel %vm841, 1, 0
        %v1002 = vsel %vm842, 1, 0
        %v1003 = vsel %vm843, 1, 0
        %v1004 = vsel %vm844, 1, 0
        %v1005 = vsel %vm845, 1, 0
        %v1006 = vsel %vm846, 1, 0
        %v1007 = vsel %vm847, 1, 0
        %v1008 = vsel %vm848, 1, 0
        %v1009 = vsel %vm849, 1, 0
        %v1010 = vsel %vm850, 1, 0
        %v1011 = vsel %vm851, 1, 0
        %v1012 = vsel %vm852, 1, 0
        %v1013 = vsel %vm853, 1, 0
        %v1014 = vsel %vm854, 1, 0
        %v1015 = vsel %vm855, 1, 0
        %v1016 = vsel %vm856, 1, 0
        %v1017 = vsel %vm857, 1, 0
        %v1018 = vsel %vm858, 1, 0
        %v1019 = vsel %vm859, 1, 0
        %v1020 = vsel %vm860, 1, 0
        %v1021 = vsel %vm861, 1, 0
        %v1022 = vsel %vm862, 1, 0
        %v1023 = vsel %vm863, 1, 0
        %v1024 = vsel %vm864, 1, 0
        %v1025 = vsel %vm865, 1, 0
        %v1026 = vsel %vm866, 1, 0
        %v1027 = vsel %vm867, 1, 0
        %v1028 = vsel %vm868, 1, 0
        %v1029 = vsel %vm869, 1, 0
        %v1030 = vsel %vm870, 1, 0
        %v1031 = vsel %vm871, 1, 0
        %v1032 = vsel %vm872, 1, 0
        %v1033 = vsel %vm873, 1, 0
        %v1034 = vsel %vm874, 1, 0
        %v1035 = vsel %vm875, 1, 0
        %v1036 = vsel %vm876, 1, 0
        %v1037 = vsel %vm877, 1, 0
        %v1038 = vsel %vm878, 1, 0
        %v1039 = vsel %vm879, 1, 0
        %v1040 = vsel %vm880, 1, 0
        %v1041 = vsel %vm881, 1, 0
        %v1042 = vsel %vm882, 1, 0
        %v1043 = vsel %vm883, 1, 0
        %v1044 = vsel %vm884, 1, 0
        %v1045 = vcvt.s32.f32 %v885
        %v1046 = vcvt.s32.f32 %v886
        %v1047 = vcvt.s32.f32 %v887
        %v1048 = vcvt.s32.f32 %v888
        %v1049 = vcvt.s32.f32 %v889
        %v1050 = vcvt.s32.f32 %v890
        %v1051 = vcvt.s32.f32 %v891
        %v1052 = vcvt.s32.f32 %v892
        %v1053 = vcvt.s32.f32 %v893
        %v1054 = vcvt.s32.f32 %v894
        %v1055 = vcvt.s32.f32 %v895
        %v1056 = vcvt.s32.f32 %v896
        %v1057 = vcvt.s32.f32 %v897
        %v1058 = vcvt.s32.f32 %v898
        %v1059 = vcvt.s32.f32 %v899
        %v1060 = vcvt.s32.f32 %v900
        %v1061 = vcvt.s32.f32 %v901
        %v1062 = vcvt.s32.f32 %v902
        %v1063 = vcvt.s32.f32 %v903
        %v1064 = vcvt.s32.f32 %v904
        %v1065 = vcvt.s32.f32 %v905
        %v1066 = vcvt.s32.f32 %v906
        %v1067 = vcvt.s32.f32 %v907
        %v1068 = vcvt.s32.f32 %v908
        %v1069 = vcvt.s32.f32 %v909
        %v1070 = vcvt.s32.f32 %v910
        %v1071 = vcvt.s32.f32 %v911
        %v1072 = vcvt.s32.f32 %v912
        %v1073 = vcvt.s32.f32 %v913
        %v1074 = vcvt.s32.f32 %v914
        %v1075 = vcvt.s32.f32 %v915
        %v1076 = vcvt.s32.f32 %v916
        %v1077 = vcvt.s32.f32 %v917
        %v1078 = vcvt.s32.f32 %v918
        %v1079 = vcvt.s32.f32 %v919
        %v1080 = vcvt.s32.f32 %v920
        %v1081 = vcvt.s32.f32 %v921
        %v1082 = vcvt.s32.f32 %v922
        %v1083 = vcvt.s32.f32 %v923
        %v1084 = vcvt.s32.f32 %v924
        %v1085 = vcvt.s32.f32 %v925
        %v1086 = vcvt.s32.f32 %v926
        %v1087 = vcvt.s32.f32 %v927
        %v1088 = vcvt.s32.f32 %v928
        %v1089 = vcvt.s32.f32 %v929
        %v1090 = vcvt.s32.f32 %v930
        %v1091 = vcvt.s32.f32 %v931
        %v1092 = vcvt.s32.f32 %v932
        %v1093 = vcvt.s32.f32 %v933
        %v1094 = vcvt.s32.f32 %v934
        %v1095 = vcvt.s32.f32 %v935
        %v1096 = vcvt.s32.f32 %v936
        %v1097 = vcvt.s32.f32 %v937
        %v1098 = vcvt.s32.f32 %v938
        %v1099 = vcvt.s32.f32 %v939
        %v1100 = vcvt.s32.f32 %v940
        %v1101 = vcvt.s32.f32 %v941
        %v1102 = vcvt.s32.f32 %v942
        %v1103 = vcvt.s32.f32 %v943
        %v1104 = vcvt.s32.f32 %v944
        %v1105 = vcvt.s32.f32 %v945
        %v1106 = vcvt.s32.f32 %v946
        %v1107 = vcvt.s32.f32 %v947
        %v1108 = vcvt.s32.f32 %v948
        %v1109 = vcvt.s32.f32 %v949
        %v1110 = vcvt.s32.f32 %v950
        %v1111 = vcvt.s32.f32 %v951
        %v1112 = vcvt.s32.f32 %v952
        %v1113 = vcvt.s32.f32 %v953
        %v1114 = vcvt.s32.f32 %v954
        %v1115 = vcvt.s32.f32 %v955
        %v1116 = vcvt.s32.f32 %v956
        %v1117 = vcvt.s32.f32 %v957
        %v1118 = vcvt.s32.f32 %v958
        %v1119 = vcvt.s32.f32 %v959
        %v1120 = vcvt.s32.f32 %v960
        %v1121 = vcvt.s32.f32 %v961
        %v1122 = vcvt.s32.f32 %v962
        %v1123 = vcvt.s32.f32 %v963
        %v1124 = vcvt.s32.f32 %v964
        %v1125 = vcvt.s32.f32 %v965
        %v1126 = vcvt.s32.f32 %v966
        %v1127 = vcvt.s32.f32 %v967
        %v1128 = vcvt.s32.f32 %v968
        %v1129 = vcvt.s32.f32 %v969
        %v1130 = vcvt.s32.f32 %v970
        %v1131 = vcvt.s32.f32 %v971
        %v1132 = vcvt.s32.f32 %v972
        %v1133 = vcvt.s32.f32 %v973
        %v1134 = vcvt.s32.f32 %v974
        %v1135 = vcvt.s32.f32 %v975
        %v1136 = vcvt.s32.f32 %v976
        %v1137 = vcvt.s32.f32 %v977
        %v1138 = vcvt.s32.f32 %v978
        %v1139 = vcvt.s32.f32 %v979
        %v1140 = vcvt.s32.f32 %v980
        %v1141 = vcvt.s32.f32 %v981
        %v1142 = vcvt.s32.f32 %v982
        %v1143 = vcvt.s32.f32 %v983
        %v1144 = vcvt.s32.f32 %v984
        %v1145 = vcvt.s32.f32 %v985
        %v1146 = vcvt.s32.f32 %v986
        %v1147 = vcvt.s32.f32 %v987
        %v1148 = vcvt.s32.f32 %v988
        %v1149 = vcvt.s32.f32 %v989
        %v1150 = vcvt.s32.f32 %v990
        %v1151 = vcvt.s32.f32 %v991
        %v1152 = vcvt.s32.f32 %v992
        %v1153 = vcvt.s32.f32 %v993
        %v1154 = vcvt.s32.f32 %v994
        %v1155 = vcvt.s32.f32 %v995
        %v1156 = vcvt.s32.f32 %v996
        %v1157 = vcvt.s32.f32 %v997
        %v1158 = vcvt.s32.f32 %v998
        %v1159 = vcvt.s32.f32 %v999
        %v1160 = vcvt.s32.f32 %v1000
        %v1161 = vcvt.s32.f32 %v1001
        %v1162 = vcvt.s32.f32 %v1002
        %v1163 = vcvt.s32.f32 %v1003
        %v1164 = vcvt.s32.f32 %v1004
        %v1165 = vcvt.s32.f32 %v1005
        %v1166 = vcvt.s32.f32 %v1006
        %v1167 = vcvt.s32.f32 %v1007
        %v1168 = vcvt.s32.f32 %v1008
        %v1169 = vcvt.s32.f32 %v1009
        %v1170 = vcvt.s32.f32 %v1010
        %v1171 = vcvt.s32.f32 %v1011
        %v1172 = vcvt.s32.f32 %v1012
        %v1173 = vcvt.s32.f32 %v1013
        %v1174 = vcvt.s32.f32 %v1014
        %v1175 = vcvt.s32.f32 %v1015
        %v1176 = vcvt.s32.f32 %v1016
        %v1177 = vcvt.s32.f32 %v1017
        %v1178 = vcvt.s32.f32 %v1018
        %v1179 = vcvt.s32.f32 %v1019
        %v1180 = vcvt.s32.f32 %v1020
        %v1181 = vcvt.s32.f32 %v1021
        %v1182 = vcvt.s32.f32 %v1022
        %v1183 = vcvt.s32.f32 %v1023
        %v1184 = vcvt.s32.f32 %v1024
        %v1185 = vcvt.s32.f32 %v1025
        %v1186 = vcvt.s32.f32 %v1026
        %v1187 = vcvt.s32.f32 %v1027
        %v1188 = vcvt.s32.f32 %v1028
        %v1189 = vcvt.s32.f32 %v1029
        %v1190 = vcvt.s32.f32 %v1030
        %v1191 = vcvt.s32.f32 %v1031
        %v1192 = vcvt.s32.f32 %v1032
        %v1193 = vcvt.s32.f32 %v1033
        %v1194 = vcvt.s32.f32 %v1034
        %v1195 = vcvt.s32.f32 %v1035
        %v1196 = vcvt.s32.f32 %v1036
        %v1197 = vcvt.s32.f32 %v1037
        %v1198 = vcvt.s32.f32 %v1038
        %v1199 = vcvt.s32.f32 %v1039
        %v1200 = vcvt.s32.f32 %v1040
        %v1201 = vcvt.s32.f32 %v1041
        %v1202 = vcvt.s32.f32 %v1042
        %v1203 = vcvt.s32.f32 %v1043
        %v1204 = vcvt.s32.f32 %v1044
        %v1205 = vpack.c.bf16 %v1053, %v1045
        %v1206 = vpack.c.bf16 %v1054, %v1046
        %v1207 = vpack.c.bf16 %v1055, %v1047
        %v1208 = vpack.c.bf16 %v1056, %v1048
        %v1209 = vpack.c.bf16 %v1057, %v1049
        %v1210 = vpack.c.bf16 %v1058, %v1050
        %v1211 = vpack.c.bf16 %v1059, %v1051
        %v1212 = vpack.c.bf16 %v1060, %v1052
        %v1213 = vpack.c.bf16 %v1069, %v1061
        %v1214 = vpack.c.bf16 %v1070, %v1062
        %v1215 = vpack.c.bf16 %v1071, %v1063
        %v1216 = vpack.c.bf16 %v1072, %v1064
        %v1217 = vpack.c.bf16 %v1073, %v1065
        %v1218 = vpack.c.bf16 %v1074, %v1066
        %v1219 = vpack.c.bf16 %v1075, %v1067
        %v1220 = vpack.c.bf16 %v1076, %v1068
        %v1221 = vpack.c.bf16 %v1085, %v1077
        %v1222 = vpack.c.bf16 %v1086, %v1078
        %v1223 = vpack.c.bf16 %v1087, %v1079
        %v1224 = vpack.c.bf16 %v1088, %v1080
        %v1225 = vpack.c.bf16 %v1089, %v1081
        %v1226 = vpack.c.bf16 %v1090, %v1082
        %v1227 = vpack.c.bf16 %v1091, %v1083
        %v1228 = vpack.c.bf16 %v1092, %v1084
        %v1229 = vpack.c.bf16 %v1101, %v1093
        %v1230 = vpack.c.bf16 %v1102, %v1094
        %v1231 = vpack.c.bf16 %v1103, %v1095
        %v1232 = vpack.c.bf16 %v1104, %v1096
        %v1233 = vpack.c.bf16 %v1105, %v1097
        %v1234 = vpack.c.bf16 %v1106, %v1098
        %v1235 = vpack.c.bf16 %v1107, %v1099
        %v1236 = vpack.c.bf16 %v1108, %v1100
        %v1237 = vpack.c.bf16 %v1117, %v1109
        %v1238 = vpack.c.bf16 %v1118, %v1110
        %v1239 = vpack.c.bf16 %v1119, %v1111
        %v1240 = vpack.c.bf16 %v1120, %v1112
        %v1241 = vpack.c.bf16 %v1121, %v1113
        %v1242 = vpack.c.bf16 %v1122, %v1114
        %v1243 = vpack.c.bf16 %v1123, %v1115
        %v1244 = vpack.c.bf16 %v1124, %v1116
        %v1245 = vpack.c.bf16 %v1133, %v1125
        %v1246 = vpack.c.bf16 %v1134, %v1126
        %v1247 = vpack.c.bf16 %v1135, %v1127
        %v1248 = vpack.c.bf16 %v1136, %v1128
        %v1249 = vpack.c.bf16 %v1137, %v1129
        %v1250 = vpack.c.bf16 %v1138, %v1130
        %v1251 = vpack.c.bf16 %v1139, %v1131
        %v1252 = vpack.c.bf16 %v1140, %v1132
        %v1253 = vpack.c.bf16 %v1149, %v1141
        %v1254 = vpack.c.bf16 %v1150, %v1142
        %v1255 = vpack.c.bf16 %v1151, %v1143
        %v1256 = vpack.c.bf16 %v1152, %v1144
        %v1257 = vpack.c.bf16 %v1153, %v1145
        %v1258 = vpack.c.bf16 %v1154, %v1146
        %v1259 = vpack.c.bf16 %v1155, %v1147
        %v1260 = vpack.c.bf16 %v1156, %v1148
        %v1261 = vpack.c.bf16 %v1165, %v1157
        %v1262 = vpack.c.bf16 %v1166, %v1158
        %v1263 = vpack.c.bf16 %v1167, %v1159
        %v1264 = vpack.c.bf16 %v1168, %v1160
        %v1265 = vpack.c.bf16 %v1169, %v1161
        %v1266 = vpack.c.bf16 %v1170, %v1162
        %v1267 = vpack.c.bf16 %v1171, %v1163
        %v1268 = vpack.c.bf16 %v1172, %v1164
        %v1269 = vpack.c.bf16 %v1181, %v1173
        %v1270 = vpack.c.bf16 %v1182, %v1174
        %v1271 = vpack.c.bf16 %v1183, %v1175
        %v1272 = vpack.c.bf16 %v1184, %v1176
        %v1273 = vpack.c.bf16 %v1185, %v1177
        %v1274 = vpack.c.bf16 %v1186, %v1178
        %v1275 = vpack.c.bf16 %v1187, %v1179
        %v1276 = vpack.c.bf16 %v1188, %v1180
        %v1277 = vpack.c.bf16 %v1197, %v1189
        %v1278 = vpack.c.bf16 %v1198, %v1190
        %v1279 = vpack.c.bf16 %v1199, %v1191
        %v1280 = vpack.c.bf16 %v1200, %v1192
        %v1281 = vpack.c.bf16 %v1201, %v1193
        %v1282 = vpack.c.bf16 %v1202, %v1194
        %v1283 = vpack.c.bf16 %v1203, %v1195
        %v1284 = vpack.c.bf16 %v1204, %v1196
        %v1285 = vld [vmem:[%s1] sm:$0xff]
        %v1286 = vld [vmem:[%s1 + $0x8] sm:$0xff]
        %v1287 = vld [vmem:[%s1 + $0x10] sm:$0xff]
        %v1288 = vld [vmem:[%s1 + $0x18] sm:$0xff]
        %v1289 = vld [vmem:[%s1 + $0x20] sm:$0xff]
        %v1290 = vld [vmem:[%s1 + $0x28] sm:$0xff]
        %v1291 = vld [vmem:[%s1 + $0x30] sm:$0xff]
        %v1292 = vld [vmem:[%s1 + $0x38] sm:$0xff]
        %v1293 = vld [vmem:[%s2] sm:$0xff]
        %v1294 = vld [vmem:[%s2 + $0x8] sm:$0xff]
        %v1295 = vld [vmem:[%s2 + $0x10] sm:$0xff]
        %v1296 = vld [vmem:[%s2 + $0x18] sm:$0xff]
        %v1297 = vld [vmem:[%s2 + $0x20] sm:$0xff]
        %v1298 = vld [vmem:[%s2 + $0x28] sm:$0xff]
        %v1299 = vld [vmem:[%s2 + $0x30] sm:$0xff]
        %v1300 = vld [vmem:[%s2 + $0x38] sm:$0xff]
        %1302 = vset.pattern.permute.xlu0 0
        %1303 = vperm.xlu0 %1302, %v1293
        %v1304 = vpop.permute.xlu0 %1303
        %1307 = vset.pattern.permute.xlu0 0
        %1308 = vperm.xlu0 %1307, %v1294
        %v1309 = vpop.permute.xlu0 %1308
        %1312 = vset.pattern.permute.xlu0 0
        %1313 = vperm.xlu0 %1312, %v1295
        %v1314 = vpop.permute.xlu0 %1313
        %1317 = vset.pattern.permute.xlu0 0
        %1318 = vperm.xlu0 %1317, %v1296
        %v1319 = vpop.permute.xlu0 %1318
        %1322 = vset.pattern.permute.xlu0 0
        %1323 = vperm.xlu0 %1322, %v1297
        %v1324 = vpop.permute.xlu0 %1323
        %1327 = vset.pattern.permute.xlu0 0
        %1328 = vperm.xlu0 %1327, %v1298
        %v1329 = vpop.permute.xlu0 %1328
        %1332 = vset.pattern.permute.xlu0 0
        %1333 = vperm.xlu0 %1332, %v1299
        %v1334 = vpop.permute.xlu0 %1333
        %1337 = vset.pattern.permute.xlu0 0
        %1338 = vperm.xlu0 %1337, %v1300
        %v1339 = vpop.permute.xlu0 %1338
        %v1349 = vunpack.c.l.b16 %v1285
        %v1350 = vunpack.c.h.b16 %v1285
        %v1351 = vunpack.c.l.b16 %v1286
        %v1352 = vunpack.c.h.b16 %v1286
        %v1353 = vunpack.c.l.b16 %v1287
        %v1354 = vunpack.c.h.b16 %v1287
        %v1355 = vunpack.c.l.b16 %v1288
        %v1356 = vunpack.c.h.b16 %v1288
        %v1357 = vunpack.c.l.b16 %v1289
        %v1358 = vunpack.c.h.b16 %v1289
        %v1359 = vunpack.c.l.b16 %v1290
        %v1360 = vunpack.c.h.b16 %v1290
        %v1361 = vunpack.c.l.b16 %v1291
        %v1362 = vunpack.c.h.b16 %v1291
        %v1363 = vunpack.c.l.b16 %v1292
        %v1364 = vunpack.c.h.b16 %v1292
        %v1365 = vpack.c.b16 %v1351, %v1349
        %v1366 = vpack.c.b16 %v1352, %v1350
        %v1367 = vpack.c.b16 %v1355, %v1353
        %v1368 = vpack.c.b16 %v1356, %v1354
        %v1369 = vpack.c.b16 %v1359, %v1357
        %v1370 = vpack.c.b16 %v1360, %v1358
        %v1371 = vpack.c.b16 %v1363, %v1361
        %v1372 = vpack.c.b16 %v1364, %v1362
        %vm1377 = vcmask 261120
        %v1379 = vsel %vm1377, %v1366, 0
        %v1382 = vsel %vm1377, %v1368, 0
        %v1385 = vsel %vm1377, %v1370, 0
        %v1388 = vsel %vm1377, %v1372, 0
        %1390 = vmatprep.subr.bf16.mxu0 %v1262
        %1391 = vmatpush1.bf16.msra.mxu0 %v1261
        %1392 = vmatprep.subr.bf16.mxu0 %v1254
        %1393 = vmatpush1.bf16.msra.mxu0 %v1253
        %1394 = vmatprep.subr.bf16.mxu0 %v1246
        %1395 = vmatpush1.bf16.msra.mxu0 %v1245
        %1396 = vmatprep.subr.bf16.mxu0 %v1238
        %1397 = vmatpush1.bf16.msra.mxu0 %v1237
        %1398 = vmatprep.subr.bf16.mxu0 %v1230
        %1399 = vmatpush1.bf16.msra.mxu0 %v1229
        %1400 = vmatprep.subr.bf16.mxu0 %v1222
        %1401 = vmatpush1.bf16.msra.mxu0 %v1221
        %1402 = vmatprep.subr.bf16.mxu0 %v1214
        %1403 = vmatpush1.bf16.msra.mxu0 %v1213
        %1404 = vmatprep.subr.bf16.mxu0 %v1206
        %1405 = vmatpush1.bf16.msra.mxu0 %v1205
        %1406 = vmatprep.subr.bf16.mxu0 0
        %1407 = vmatpush2.bf16.msra.mxu0 0
        %1408 = vmatprep.subr.bf16.mxu0 0
        %1409 = vmatpush2.bf16.msra.mxu0 0
        %1410 = vmatprep.subr.bf16.mxu0 0
        %1411 = vmatpush2.bf16.msra.mxu0 0
        %1412 = vmatprep.subr.bf16.mxu0 0
        %1413 = vmatpush2.bf16.msra.mxu0 0
        %1414 = vmatprep.subr.bf16.mxu0 0
        %1415 = vmatpush2.bf16.msra.mxu0 0
        %1416 = vmatprep.subr.bf16.mxu0 0
        %1417 = vmatpush2.bf16.msra.mxu0 0
        %1418 = vmatprep.subr.bf16.mxu0 %v1278
        %1419 = vmatpush2.bf16.msra.mxu0 %v1277
        %1420 = vmatprep.subr.bf16.mxu0 %v1270
        %1421 = vmatpush2.bf16.msra.mxu0 %v1269
        %1422 = vmatprep.mubr.bf16.mxu0 %v1379
        %1423 = vmatmul.mubr.bf16.gmra.mxu0 %v1365
        %v1424 = vpop.f32.mrf.mxu0
        %v1425 = vadd.f32 %v1304, %v1424
        %v1426 = vpop.f32.mrf.mxu0
        %v1427 = vadd.f32 %v1304, %v1426
        %v1428 = vpop.f32.mrf.mxu0
        %v1429 = vadd.f32 %v1309, %v1428
        %v1430 = vpop.f32.mrf.mxu0
        %v1431 = vadd.f32 %v1309, %v1430
        %1432 = vmatprep.mubr.bf16.mxu0 %v1382
        %1433 = vmatmul.mubr.bf16.gmra.mxu0 %v1367
        %v1434 = vpop.f32.mrf.mxu0
        %v1435 = vadd.f32 %v1314, %v1434
        %v1436 = vpop.f32.mrf.mxu0
        %v1437 = vadd.f32 %v1314, %v1436
        %v1438 = vpop.f32.mrf.mxu0
        %v1439 = vadd.f32 %v1319, %v1438
        %v1440 = vpop.f32.mrf.mxu0
        %v1441 = vadd.f32 %v1319, %v1440
        %1442 = vmatprep.mubr.bf16.mxu0 %v1385
        %1443 = vmatmul.mubr.bf16.gmra.mxu0 %v1369
        %v1444 = vpop.f32.mrf.mxu0
        %v1445 = vadd.f32 %v1324, %v1444
        %v1446 = vpop.f32.mrf.mxu0
        %v1447 = vadd.f32 %v1324, %v1446
        %v1448 = vpop.f32.mrf.mxu0
        %v1449 = vadd.f32 %v1329, %v1448
        %v1450 = vpop.f32.mrf.mxu0
        %v1451 = vadd.f32 %v1329, %v1450
        %1452 = vmatprep.mubr.bf16.mxu0 %v1388
        %1453 = vmatmul.mubr.bf16.gmra.mxu0 %v1371
        %v1454 = vpop.f32.mrf.mxu0
        %v1455 = vadd.f32 %v1334, %v1454
        %v1456 = vpop.f32.mrf.mxu0
        %v1457 = vadd.f32 %v1334, %v1456
        %v1458 = vpop.f32.mrf.mxu0
        %v1459 = vadd.f32 %v1339, %v1458
        %v1460 = vpop.f32.mrf.mxu0
        %v1461 = vadd.f32 %v1339, %v1460
        %1462 = vdwg.mxu0
        %1463 = vmatprep.subr.bf16.mxu0 %v1264
        %1464 = vmatpush1.bf16.msra.mxu0 %v1263
        %1465 = vmatprep.subr.bf16.mxu0 %v1256
        %1466 = vmatpush1.bf16.msra.mxu0 %v1255
        %1467 = vmatprep.subr.bf16.mxu0 %v1248
        %1468 = vmatpush1.bf16.msra.mxu0 %v1247
        %1469 = vmatprep.subr.bf16.mxu0 %v1240
        %1470 = vmatpush1.bf16.msra.mxu0 %v1239
        %1471 = vmatprep.subr.bf16.mxu0 %v1232
        %1472 = vmatpush1.bf16.msra.mxu0 %v1231
        %1473 = vmatprep.subr.bf16.mxu0 %v1224
        %1474 = vmatpush1.bf16.msra.mxu0 %v1223
        %1475 = vmatprep.subr.bf16.mxu0 %v1216
        %1476 = vmatpush1.bf16.msra.mxu0 %v1215
        %1477 = vmatprep.subr.bf16.mxu0 %v1208
        %1478 = vmatpush1.bf16.msra.mxu0 %v1207
        %1479 = vmatprep.subr.bf16.mxu0 0
        %1480 = vmatpush2.bf16.msra.mxu0 0
        %1481 = vmatprep.subr.bf16.mxu0 0
        %1482 = vmatpush2.bf16.msra.mxu0 0
        %1483 = vmatprep.subr.bf16.mxu0 0
        %1484 = vmatpush2.bf16.msra.mxu0 0
        %1485 = vmatprep.subr.bf16.mxu0 0
        %1486 = vmatpush2.bf16.msra.mxu0 0
        %1487 = vmatprep.subr.bf16.mxu0 0
        %1488 = vmatpush2.bf16.msra.mxu0 0
        %1489 = vmatprep.subr.bf16.mxu0 0
        %1490 = vmatpush2.bf16.msra.mxu0 0
        %1491 = vmatprep.subr.bf16.mxu0 %v1280
        %1492 = vmatpush2.bf16.msra.mxu0 %v1279
        %1493 = vmatprep.subr.bf16.mxu0 %v1272
        %1494 = vmatpush2.bf16.msra.mxu0 %v1271
        %1495 = vmatprep.mubr.bf16.mxu0 %v1379
        %1496 = vmatmul.mubr.bf16.gmra.mxu0 %v1365
        %v1497 = vpop.f32.mrf.mxu0
        %v1498 = vadd.f32 %v1304, %v1497
        %v1499 = vpop.f32.mrf.mxu0
        %v1500 = vadd.f32 %v1304, %v1499
        %v1501 = vpop.f32.mrf.mxu0
        %v1502 = vadd.f32 %v1309, %v1501
        %v1503 = vpop.f32.mrf.mxu0
        %v1504 = vadd.f32 %v1309, %v1503
        %1505 = vmatprep.mubr.bf16.mxu0 %v1382
        %1506 = vmatmul.mubr.bf16.gmra.mxu0 %v1367
        %v1507 = vpop.f32.mrf.mxu0
        %v1508 = vadd.f32 %v1314, %v1507
        %v1509 = vpop.f32.mrf.mxu0
        %v1510 = vadd.f32 %v1314, %v1509
        %v1511 = vpop.f32.mrf.mxu0
        %v1512 = vadd.f32 %v1319, %v1511
        %v1513 = vpop.f32.mrf.mxu0
        %v1514 = vadd.f32 %v1319, %v1513
        %1515 = vmatprep.mubr.bf16.mxu0 %v1385
        %1516 = vmatmul.mubr.bf16.gmra.mxu0 %v1369
        %v1517 = vpop.f32.mrf.mxu0
        %v1518 = vadd.f32 %v1324, %v1517
        %v1519 = vpop.f32.mrf.mxu0
        %v1520 = vadd.f32 %v1324, %v1519
        %v1521 = vpop.f32.mrf.mxu0
        %v1522 = vadd.f32 %v1329, %v1521
        %v1523 = vpop.f32.mrf.mxu0
        %v1524 = vadd.f32 %v1329, %v1523
        %1525 = vmatprep.mubr.bf16.mxu0 %v1388
        %1526 = vmatmul.mubr.bf16.gmra.mxu0 %v1371
        %v1527 = vpop.f32.mrf.mxu0
        %v1528 = vadd.f32 %v1334, %v1527
        %v1529 = vpop.f32.mrf.mxu0
        %v1530 = vadd.f32 %v1334, %v1529
        %v1531 = vpop.f32.mrf.mxu0
        %v1532 = vadd.f32 %v1339, %v1531
        %v1533 = vpop.f32.mrf.mxu0
        %v1534 = vadd.f32 %v1339, %v1533
        %1535 = vdwg.mxu0
        %1536 = vmatprep.subr.bf16.mxu0 %v1266
        %1537 = vmatpush1.bf16.msra.mxu0 %v1265
        %1538 = vmatprep.subr.bf16.mxu0 %v1258
        %1539 = vmatpush1.bf16.msra.mxu0 %v1257
        %1540 = vmatprep.subr.bf16.mxu0 %v1250
        %1541 = vmatpush1.bf16.msra.mxu0 %v1249
        %1542 = vmatprep.subr.bf16.mxu0 %v1242
        %1543 = vmatpush1.bf16.msra.mxu0 %v1241
        %1544 = vmatprep.subr.bf16.mxu0 %v1234
        %1545 = vmatpush1.bf16.msra.mxu0 %v1233
        %1546 = vmatprep.subr.bf16.mxu0 %v1226
        %1547 = vmatpush1.bf16.msra.mxu0 %v1225
        %1548 = vmatprep.subr.bf16.mxu0 %v1218
        %1549 = vmatpush1.bf16.msra.mxu0 %v1217
        %1550 = vmatprep.subr.bf16.mxu0 %v1210
        %1551 = vmatpush1.bf16.msra.mxu0 %v1209
        %1552 = vmatprep.subr.bf16.mxu0 0
        %1553 = vmatpush2.bf16.msra.mxu0 0
        %1554 = vmatprep.subr.bf16.mxu0 0
        %1555 = vmatpush2.bf16.msra.mxu0 0
        %1556 = vmatprep.subr.bf16.mxu0 0
        %1557 = vmatpush2.bf16.msra.mxu0 0
        %1558 = vmatprep.subr.bf16.mxu0 0
        %1559 = vmatpush2.bf16.msra.mxu0 0
        %1560 = vmatprep.subr.bf16.mxu0 0
        %1561 = vmatpush2.bf16.msra.mxu0 0
        %1562 = vmatprep.subr.bf16.mxu0 0
        %1563 = vmatpush2.bf16.msra.mxu0 0
        %1564 = vmatprep.subr.bf16.mxu0 %v1282
        %1565 = vmatpush2.bf16.msra.mxu0 %v1281
        %1566 = vmatprep.subr.bf16.mxu0 %v1274
        %1567 = vmatpush2.bf16.msra.mxu0 %v1273
        %1568 = vmatprep.mubr.bf16.mxu0 %v1379
        %1569 = vmatmul.mubr.bf16.gmra.mxu0 %v1365
        %v1570 = vpop.f32.mrf.mxu0
        %v1571 = vadd.f32 %v1304, %v1570
        %v1572 = vpop.f32.mrf.mxu0
        %v1573 = vadd.f32 %v1304, %v1572
        %v1574 = vpop.f32.mrf.mxu0
        %v1575 = vadd.f32 %v1309, %v1574
        %v1576 = vpop.f32.mrf.mxu0
        %v1577 = vadd.f32 %v1309, %v1576
        %1578 = vmatprep.mubr.bf16.mxu0 %v1382
        %1579 = vmatmul.mubr.bf16.gmra.mxu0 %v1367
        %v1580 = vpop.f32.mrf.mxu0
        %v1581 = vadd.f32 %v1314, %v1580
        %v1582 = vpop.f32.mrf.mxu0
        %v1583 = vadd.f32 %v1314, %v1582
        %v1584 = vpop.f32.mrf.mxu0
        %v1585 = vadd.f32 %v1319, %v1584
        %v1586 = vpop.f32.mrf.mxu0
        %v1587 = vadd.f32 %v1319, %v1586
        %1588 = vmatprep.mubr.bf16.mxu0 %v1385
        %1589 = vmatmul.mubr.bf16.gmra.mxu0 %v1369
        %v1590 = vpop.f32.mrf.mxu0
        %v1591 = vadd.f32 %v1324, %v1590
        %v1592 = vpop.f32.mrf.mxu0
        %v1593 = vadd.f32 %v1324, %v1592
        %v1594 = vpop.f32.mrf.mxu0
        %v1595 = vadd.f32 %v1329, %v1594
        %v1596 = vpop.f32.mrf.mxu0
        %v1597 = vadd.f32 %v1329, %v1596
        %1598 = vmatprep.mubr.bf16.mxu0 %v1388
        %1599 = vmatmul.mubr.bf16.gmra.mxu0 %v1371
        %v1600 = vpop.f32.mrf.mxu0
        %v1601 = vadd.f32 %v1334, %v1600
        %v1602 = vpop.f32.mrf.mxu0
        %v1603 = vadd.f32 %v1334, %v1602
        %v1604 = vpop.f32.mrf.mxu0
        %v1605 = vadd.f32 %v1339, %v1604
        %v1606 = vpop.f32.mrf.mxu0
        %v1607 = vadd.f32 %v1339, %v1606
        %1608 = vdwg.mxu0
        %1609 = vmatprep.subr.bf16.mxu0 %v1268
        %1610 = vmatpush1.bf16.msra.mxu0 %v1267
        %1611 = vmatprep.subr.bf16.mxu0 %v1260
        %1612 = vmatpush1.bf16.msra.mxu0 %v1259
        %1613 = vmatprep.subr.bf16.mxu0 %v1252
        %1614 = vmatpush1.bf16.msra.mxu0 %v1251
        %1615 = vmatprep.subr.bf16.mxu0 %v1244
        %1616 = vmatpush1.bf16.msra.mxu0 %v1243
        %1617 = vmatprep.subr.bf16.mxu0 %v1236
        %1618 = vmatpush1.bf16.msra.mxu0 %v1235
        %1619 = vmatprep.subr.bf16.mxu0 %v1228
        %1620 = vmatpush1.bf16.msra.mxu0 %v1227
        %1621 = vmatprep.subr.bf16.mxu0 %v1220
        %1622 = vmatpush1.bf16.msra.mxu0 %v1219
        %1623 = vmatprep.subr.bf16.mxu0 %v1212
        %1624 = vmatpush1.bf16.msra.mxu0 %v1211
        %1625 = vmatprep.subr.bf16.mxu0 0
        %1626 = vmatpush2.bf16.msra.mxu0 0
        %1627 = vmatprep.subr.bf16.mxu0 0
        %1628 = vmatpush2.bf16.msra.mxu0 0
        %1629 = vmatprep.subr.bf16.mxu0 0
        %1630 = vmatpush2.bf16.msra.mxu0 0
        %1631 = vmatprep.subr.bf16.mxu0 0
        %1632 = vmatpush2.bf16.msra.mxu0 0
        %1633 = vmatprep.subr.bf16.mxu0 0
        %1634 = vmatpush2.bf16.msra.mxu0 0
        %1635 = vmatprep.subr.bf16.mxu0 0
        %1636 = vmatpush2.bf16.msra.mxu0 0
        %1637 = vmatprep.subr.bf16.mxu0 %v1284
        %1638 = vmatpush2.bf16.msra.mxu0 %v1283
        %1639 = vmatprep.subr.bf16.mxu0 %v1276
        %1640 = vmatpush2.bf16.msra.mxu0 %v1275
        %1641 = vmatprep.mubr.bf16.mxu0 %v1379
        %1642 = vmatmul.mubr.bf16.gmra.mxu0 %v1365
        %v1643 = vpop.f32.mrf.mxu0
        %v1644 = vadd.f32 %v1304, %v1643
        %v1645 = vpop.f32.mrf.mxu0
        %v1646 = vadd.f32 %v1304, %v1645
        %v1647 = vpop.f32.mrf.mxu0
        %v1648 = vadd.f32 %v1309, %v1647
        %v1649 = vpop.f32.mrf.mxu0
        %v1650 = vadd.f32 %v1309, %v1649
        %1651 = vmatprep.mubr.bf16.mxu0 %v1382
        %1652 = vmatmul.mubr.bf16.gmra.mxu0 %v1367
        %v1653 = vpop.f32.mrf.mxu0
        %v1654 = vadd.f32 %v1314, %v1653
        %v1655 = vpop.f32.mrf.mxu0
        %v1656 = vadd.f32 %v1314, %v1655
        %v1657 = vpop.f32.mrf.mxu0
        %v1658 = vadd.f32 %v1319, %v1657
        %v1659 = vpop.f32.mrf.mxu0
        %v1660 = vadd.f32 %v1319, %v1659
        %1661 = vmatprep.mubr.bf16.mxu0 %v1385
        %1662 = vmatmul.mubr.bf16.gmra.mxu0 %v1369
        %v1663 = vpop.f32.mrf.mxu0
        %v1664 = vadd.f32 %v1324, %v1663
        %v1665 = vpop.f32.mrf.mxu0
        %v1666 = vadd.f32 %v1324, %v1665
        %v1667 = vpop.f32.mrf.mxu0
        %v1668 = vadd.f32 %v1329, %v1667
        %v1669 = vpop.f32.mrf.mxu0
        %v1670 = vadd.f32 %v1329, %v1669
        %1671 = vmatprep.mubr.bf16.mxu0 %v1388
        %1672 = vmatmul.mubr.bf16.gmra.mxu0 %v1371
        %v1673 = vpop.f32.mrf.mxu0
        %v1674 = vadd.f32 %v1334, %v1673
        %v1675 = vpop.f32.mrf.mxu0
        %v1676 = vadd.f32 %v1334, %v1675
        %v1677 = vpop.f32.mrf.mxu0
        %v1678 = vadd.f32 %v1339, %v1677
        %v1679 = vpop.f32.mrf.mxu0
        %v1680 = vadd.f32 %v1339, %v1679
        %1681 = vdwg.mxu0
        %v1682 = vmax.f32 %v1425, 0.0
        %v1683 = vmax.f32 %v1427, 0.0
        %v1684 = vmax.f32 %v1498, 0.0
        %v1685 = vmax.f32 %v1500, 0.0
        %v1686 = vmax.f32 %v1571, 0.0
        %v1687 = vmax.f32 %v1573, 0.0
        %v1688 = vmax.f32 %v1644, 0.0
        %v1689 = vmax.f32 %v1646, 0.0
        %v1690 = vmax.f32 %v1429, 0.0
        %v1691 = vmax.f32 %v1431, 0.0
        %v1692 = vmax.f32 %v1502, 0.0
        %v1693 = vmax.f32 %v1504, 0.0
        %v1694 = vmax.f32 %v1575, 0.0
        %v1695 = vmax.f32 %v1577, 0.0
        %v1696 = vmax.f32 %v1648, 0.0
        %v1697 = vmax.f32 %v1650, 0.0
        %v1698 = vmax.f32 %v1435, 0.0
        %v1699 = vmax.f32 %v1437, 0.0
        %v1700 = vmax.f32 %v1508, 0.0
        %v1701 = vmax.f32 %v1510, 0.0
        %v1702 = vmax.f32 %v1581, 0.0
        %v1703 = vmax.f32 %v1583, 0.0
        %v1704 = vmax.f32 %v1654, 0.0
        %v1705 = vmax.f32 %v1656, 0.0
        %v1706 = vmax.f32 %v1439, 0.0
        %v1707 = vmax.f32 %v1441, 0.0
        %v1708 = vmax.f32 %v1512, 0.0
        %v1709 = vmax.f32 %v1514, 0.0
        %v1710 = vmax.f32 %v1585, 0.0
        %v1711 = vmax.f32 %v1587, 0.0
        %v1712 = vmax.f32 %v1658, 0.0
        %v1713 = vmax.f32 %v1660, 0.0
        %v1714 = vmax.f32 %v1445, 0.0
        %v1715 = vmax.f32 %v1447, 0.0
        %v1716 = vmax.f32 %v1518, 0.0
        %v1717 = vmax.f32 %v1520, 0.0
        %v1718 = vmax.f32 %v1591, 0.0
        %v1719 = vmax.f32 %v1593, 0.0
        %v1720 = vmax.f32 %v1664, 0.0
        %v1721 = vmax.f32 %v1666, 0.0
        %v1722 = vmax.f32 %v1449, 0.0
        %v1723 = vmax.f32 %v1451, 0.0
        %v1724 = vmax.f32 %v1522, 0.0
        %v1725 = vmax.f32 %v1524, 0.0
        %v1726 = vmax.f32 %v1595, 0.0
        %v1727 = vmax.f32 %v1597, 0.0
        %v1728 = vmax.f32 %v1668, 0.0
        %v1729 = vmax.f32 %v1670, 0.0
        %v1730 = vmax.f32 %v1455, 0.0
        %v1731 = vmax.f32 %v1457, 0.0
        %v1732 = vmax.f32 %v1528, 0.0
        %v1733 = vmax.f32 %v1530, 0.0
        %v1734 = vmax.f32 %v1601, 0.0
        %v1735 = vmax.f32 %v1603, 0.0
        %v1736 = vmax.f32 %v1674, 0.0
        %v1737 = vmax.f32 %v1676, 0.0
        %v1738 = vmax.f32 %v1459, 0.0
        %v1739 = vmax.f32 %v1461, 0.0
        %v1740 = vmax.f32 %v1532, 0.0
        %v1741 = vmax.f32 %v1534, 0.0
        %v1742 = vmax.f32 %v1605, 0.0
        %v1743 = vmax.f32 %v1607, 0.0
        %v1744 = vmax.f32 %v1678, 0.0
        %v1745 = vmax.f32 %v1680, 0.0
        %v1746 = vld [vmem:[%s3] sm:$0xff]
        %v1747 = vld [vmem:[%s3 + $0x8] sm:$0xff]
        %v1748 = vld [vmem:[%s3 + $0x10] sm:$0xff]
        %v1749 = vld [vmem:[%s3 + $0x18] sm:$0xff]
        %v1750 = vld [vmem:[%s3 + $0x20] sm:$0xff]
        %v1751 = vld [vmem:[%s3 + $0x28] sm:$0xff]
        %v1752 = vld [vmem:[%s3 + $0x30] sm:$0xff]
        %v1753 = vld [vmem:[%s3 + $0x38] sm:$0xff]
        %1755 = vset.pattern.permute.xlu0 0
        %1756 = vperm.xlu0 %1755, %v1746
        %v1757 = vpop.permute.xlu0 %1756
        %1760 = vset.pattern.permute.xlu0 0
        %1761 = vperm.xlu0 %1760, %v1747
        %v1762 = vpop.permute.xlu0 %1761
        %1765 = vset.pattern.permute.xlu0 0
        %1766 = vperm.xlu0 %1765, %v1748
        %v1767 = vpop.permute.xlu0 %1766
        %1770 = vset.pattern.permute.xlu0 0
        %1771 = vperm.xlu0 %1770, %v1749
        %v1772 = vpop.permute.xlu0 %1771
        %1775 = vset.pattern.permute.xlu0 0
        %1776 = vperm.xlu0 %1775, %v1750
        %v1777 = vpop.permute.xlu0 %1776
        %1780 = vset.pattern.permute.xlu0 0
        %1781 = vperm.xlu0 %1780, %v1751
        %v1782 = vpop.permute.xlu0 %1781
        %1785 = vset.pattern.permute.xlu0 0
        %1786 = vperm.xlu0 %1785, %v1752
        %v1787 = vpop.permute.xlu0 %1786
        %1790 = vset.pattern.permute.xlu0 0
        %1791 = vperm.xlu0 %1790, %v1753
        %v1792 = vpop.permute.xlu0 %1791
        %v1794 = vmul.f32 %v1682, %v1757
        %v1795 = vmul.f32 %v1683, %v1757
        %v1796 = vmul.f32 %v1684, %v1757
        %v1797 = vmul.f32 %v1685, %v1757
        %v1798 = vmul.f32 %v1686, %v1757
        %v1799 = vmul.f32 %v1687, %v1757
        %v1800 = vmul.f32 %v1688, %v1757
        %v1801 = vmul.f32 %v1689, %v1757
        %v1802 = vmul.f32 %v1690, %v1762
        %v1803 = vmul.f32 %v1691, %v1762
        %v1804 = vmul.f32 %v1692, %v1762
        %v1805 = vmul.f32 %v1693, %v1762
        %v1806 = vmul.f32 %v1694, %v1762
        %v1807 = vmul.f32 %v1695, %v1762
        %v1808 = vmul.f32 %v1696, %v1762
        %v1809 = vmul.f32 %v1697, %v1762
        %v1810 = vmul.f32 %v1698, %v1767
        %v1811 = vmul.f32 %v1699, %v1767
        %v1812 = vmul.f32 %v1700, %v1767
        %v1813 = vmul.f32 %v1701, %v1767
        %v1814 = vmul.f32 %v1702, %v1767
        %v1815 = vmul.f32 %v1703, %v1767
        %v1816 = vmul.f32 %v1704, %v1767
        %v1817 = vmul.f32 %v1705, %v1767
        %v1818 = vmul.f32 %v1706, %v1772
        %v1819 = vmul.f32 %v1707, %v1772
        %v1820 = vmul.f32 %v1708, %v1772
        %v1821 = vmul.f32 %v1709, %v1772
        %v1822 = vmul.f32 %v1710, %v1772
        %v1823 = vmul.f32 %v1711, %v1772
        %v1824 = vmul.f32 %v1712, %v1772
        %v1825 = vmul.f32 %v1713, %v1772
        %v1826 = vmul.f32 %v1714, %v1777
        %v1827 = vmul.f32 %v1715, %v1777
        %v1828 = vmul.f32 %v1716, %v1777
        %v1829 = vmul.f32 %v1717, %v1777
        %v1830 = vmul.f32 %v1718, %v1777
        %v1831 = vmul.f32 %v1719, %v1777
        %v1832 = vmul.f32 %v1720, %v1777
        %v1833 = vmul.f32 %v1721, %v1777
        %v1834 = vmul.f32 %v1722, %v1782
        %v1835 = vmul.f32 %v1723, %v1782
        %v1836 = vmul.f32 %v1724, %v1782
        %v1837 = vmul.f32 %v1725, %v1782
        %v1838 = vmul.f32 %v1726, %v1782
        %v1839 = vmul.f32 %v1727, %v1782
        %v1840 = vmul.f32 %v1728, %v1782
        %v1841 = vmul.f32 %v1729, %v1782
        %v1842 = vmul.f32 %v1730, %v1787
        %v1843 = vmul.f32 %v1731, %v1787
        %v1844 = vmul.f32 %v1732, %v1787
        %v1845 = vmul.f32 %v1733, %v1787
        %v1846 = vmul.f32 %v1734, %v1787
        %v1847 = vmul.f32 %v1735, %v1787
        %v1848 = vmul.f32 %v1736, %v1787
        %v1849 = vmul.f32 %v1737, %v1787
        %v1850 = vmul.f32 %v1738, %v1792
        %v1851 = vmul.f32 %v1739, %v1792
        %v1852 = vmul.f32 %v1740, %v1792
        %v1853 = vmul.f32 %v1741, %v1792
        %v1854 = vmul.f32 %v1742, %v1792
        %v1855 = vmul.f32 %v1743, %v1792
        %v1856 = vmul.f32 %v1744, %v1792
        %v1857 = vmul.f32 %v1745, %v1792
        %v1858 = vadd.f32 %v1794, %v1802
        %v1859 = vadd.f32 %v1858, %v1810
        %v1860 = vadd.f32 %v1859, %v1818
        %v1861 = vadd.f32 %v1860, %v1826
        %v1862 = vadd.f32 %v1861, %v1834
        %v1863 = vadd.f32 %v1862, %v1842
        %v1864 = vadd.f32 %v1863, %v1850
        %v1865 = vrot.slane %v1864, 4
        %v1866 = vadd.f32 %v1864, %v1865
        %v1867 = vrot.slane %v1866, 2
        %v1868 = vadd.f32 %v1866, %v1867
        %v1869 = vrot.slane %v1868, 1
        %v1870 = vadd.f32 %v1868, %v1869
        %v1871 = vadd.f32 %v1795, %v1803
        %v1872 = vadd.f32 %v1871, %v1811
        %v1873 = vadd.f32 %v1872, %v1819
        %v1874 = vadd.f32 %v1873, %v1827
        %v1875 = vadd.f32 %v1874, %v1835
        %v1876 = vadd.f32 %v1875, %v1843
        %v1877 = vadd.f32 %v1876, %v1851
        %v1878 = vrot.slane %v1877, 4
        %v1879 = vadd.f32 %v1877, %v1878
        %v1880 = vrot.slane %v1879, 2
        %v1881 = vadd.f32 %v1879, %v1880
        %v1882 = vrot.slane %v1881, 1
        %v1883 = vadd.f32 %v1881, %v1882
        %v1884 = vadd.f32 %v1796, %v1804
        %v1885 = vadd.f32 %v1884, %v1812
        %v1886 = vadd.f32 %v1885, %v1820
        %v1887 = vadd.f32 %v1886, %v1828
        %v1888 = vadd.f32 %v1887, %v1836
        %v1889 = vadd.f32 %v1888, %v1844
        %v1890 = vadd.f32 %v1889, %v1852
        %v1891 = vrot.slane %v1890, 4
        %v1892 = vadd.f32 %v1890, %v1891
        %v1893 = vrot.slane %v1892, 2
        %v1894 = vadd.f32 %v1892, %v1893
        %v1895 = vrot.slane %v1894, 1
        %v1896 = vadd.f32 %v1894, %v1895
        %v1897 = vadd.f32 %v1797, %v1805
        %v1898 = vadd.f32 %v1897, %v1813
        %v1899 = vadd.f32 %v1898, %v1821
        %v1900 = vadd.f32 %v1899, %v1829
        %v1901 = vadd.f32 %v1900, %v1837
        %v1902 = vadd.f32 %v1901, %v1845
        %v1903 = vadd.f32 %v1902, %v1853
        %v1904 = vrot.slane %v1903, 4
        %v1905 = vadd.f32 %v1903, %v1904
        %v1906 = vrot.slane %v1905, 2
        %v1907 = vadd.f32 %v1905, %v1906
        %v1908 = vrot.slane %v1907, 1
        %v1909 = vadd.f32 %v1907, %v1908
        %v1910 = vadd.f32 %v1798, %v1806
        %v1911 = vadd.f32 %v1910, %v1814
        %v1912 = vadd.f32 %v1911, %v1822
        %v1913 = vadd.f32 %v1912, %v1830
        %v1914 = vadd.f32 %v1913, %v1838
        %v1915 = vadd.f32 %v1914, %v1846
        %v1916 = vadd.f32 %v1915, %v1854
        %v1917 = vrot.slane %v1916, 4
        %v1918 = vadd.f32 %v1916, %v1917
        %v1919 = vrot.slane %v1918, 2
        %v1920 = vadd.f32 %v1918, %v1919
        %v1921 = vrot.slane %v1920, 1
        %v1922 = vadd.f32 %v1920, %v1921
        %v1923 = vadd.f32 %v1799, %v1807
        %v1924 = vadd.f32 %v1923, %v1815
        %v1925 = vadd.f32 %v1924, %v1823
        %v1926 = vadd.f32 %v1925, %v1831
        %v1927 = vadd.f32 %v1926, %v1839
        %v1928 = vadd.f32 %v1927, %v1847
        %v1929 = vadd.f32 %v1928, %v1855
        %v1930 = vrot.slane %v1929, 4
        %v1931 = vadd.f32 %v1929, %v1930
        %v1932 = vrot.slane %v1931, 2
        %v1933 = vadd.f32 %v1931, %v1932
        %v1934 = vrot.slane %v1933, 1
        %v1935 = vadd.f32 %v1933, %v1934
        %v1936 = vadd.f32 %v1800, %v1808
        %v1937 = vadd.f32 %v1936, %v1816
        %v1938 = vadd.f32 %v1937, %v1824
        %v1939 = vadd.f32 %v1938, %v1832
        %v1940 = vadd.f32 %v1939, %v1840
        %v1941 = vadd.f32 %v1940, %v1848
        %v1942 = vadd.f32 %v1941, %v1856
        %v1943 = vrot.slane %v1942, 4
        %v1944 = vadd.f32 %v1942, %v1943
        %v1945 = vrot.slane %v1944, 2
        %v1946 = vadd.f32 %v1944, %v1945
        %v1947 = vrot.slane %v1946, 1
        %v1948 = vadd.f32 %v1946, %v1947
        %v1949 = vadd.f32 %v1801, %v1809
        %v1950 = vadd.f32 %v1949, %v1817
        %v1951 = vadd.f32 %v1950, %v1825
        %v1952 = vadd.f32 %v1951, %v1833
        %v1953 = vadd.f32 %v1952, %v1841
        %v1954 = vadd.f32 %v1953, %v1849
        %v1955 = vadd.f32 %v1954, %v1857
        %v1956 = vrot.slane %v1955, 4
        %v1957 = vadd.f32 %v1955, %v1956
        %v1958 = vrot.slane %v1957, 2
        %v1959 = vadd.f32 %v1957, %v1958
        %v1960 = vrot.slane %v1959, 1
        %v1961 = vadd.f32 %v1959, %v1960
        %v1962 = vld [vmem:[#allocation2] sm:$0x1]
        %1964 = vset.pattern.permute.xlu0 0
        %1965 = vperm.xlu0 %1964, %v1962
        %v1966 = vpop.permute.xlu0 %1965
        %v1968 = vlaneseq
        %v1969 = vshrl.u32 %v1968, 7
        %v1970 = vsub.s32 0, %v1969
        %v1971 = vrot.slane %v1966, %v1970
        %v1972 = vadd.f32 %v1870, %v1971
        %v1973 = vadd.f32 %v1883, %v1971
        %v1974 = vadd.f32 %v1896, %v1971
        %v1975 = vadd.f32 %v1909, %v1971
        %v1976 = vadd.f32 %v1922, %v1971
        %v1977 = vadd.f32 %v1935, %v1971
        %v1978 = vadd.f32 %v1948, %v1971
        %v1979 = vadd.f32 %v1961, %v1971
        %v1988 = vcombine.low %v1972, %v1973
        %v1989 = vcombine.low %v1974, %v1975
        %v1990 = vcombine.low %v1976, %v1977
        %v1991 = vcombine.low %v1978, %v1979
        %v1993 = vunpack.c.l.s4 1966171168
        %v1994 = vunpack.c.0.s8 %v1993
        %v1995 = vlaneseq
        %v1996 = vshrl.u32 %v1995, 7
        %v1997 = vsub.s32 %v1994, %v1996
        %v1998 = vrot.slane %v1988, %v1997
        %v2000 = vunpack.c.l.s4 1966171168
        %v2001 = vunpack.c.0.s8 %v2000
        %v2002 = vlaneseq
        %v2003 = vshrl.u32 %v2002, 7
        %v2004 = vsub.s32 %v2001, %v2003
        %v2005 = vrot.slane %v1989, %v2004
        %v2007 = vunpack.c.l.s4 1966171168
        %v2008 = vunpack.c.0.s8 %v2007
        %v2009 = vlaneseq
        %v2010 = vshrl.u32 %v2009, 7
        %v2011 = vsub.s32 %v2008, %v2010
        %v2012 = vrot.slane %v1990, %v2011
        %v2014 = vunpack.c.l.s4 1966171168
        %v2015 = vunpack.c.0.s8 %v2014
        %v2016 = vlaneseq
        %v2017 = vshrl.u32 %v2016, 7
        %v2018 = vsub.s32 %v2015, %v2017
        %v2019 = vrot.slane %v1991, %v2018
        %v2020 = vcombine.low %v1998, %v2005
        %v2021 = vcombine.low %v2012, %v2019
        %v2023 = vunpack.c.l.s4 1966171168
        %v2024 = vunpack.c.0.s8 %v2023
        %v2025 = vlaneseq
        %v2026 = vshrl.u32 %v2025, 7
        %v2027 = vsub.s32 %v2024, %v2026
        %v2028 = vrot.slane %v2020, %v2027
        %v2030 = vunpack.c.l.s4 1966171168
        %v2031 = vunpack.c.0.s8 %v2030
        %v2032 = vlaneseq
        %v2033 = vshrl.u32 %v2032, 7
        %v2034 = vsub.s32 %v2031, %v2033
        %v2035 = vrot.slane %v2021, %v2034
        %v2036 = vcombine.low %v2028, %v2035
        %2038 = vst [vmem:[%s220] sm:$0xff] %v2036
        %s2039 = sand.u32 %s139, 1
        %s2040 = scalar_lea.sflag [#allocation4], %s2039
        %s2041 = sand.u32 %s139, 1
        %s2042 = smul.addr %s2041, 8
        %s2043 = scalar_lea.vmem [#allocation3], %s2042
        // Predicated region
        $region41: #{simple_nn_forward.1} parent=39 // pred_check
          %p2044 = pneg %p149
        $region42: #{simple_nn_forward.1} parent=39 // pred_check_branch
          %2046 = sbr.rel (%p2044) target = $region44
        $region43: #{simple_nn_forward.1} parent=39 // pred_region
          %s2047 = smul.u32 8, %s21
          %s2049 = ssub.s32 128, 128
          %2050 = vsyncadd %s2040, %s2049
          %s2051 = smul.addr %s2047, 16
          %s2052 = scalar_lea.hbm %s5, %s2051
          %s2054 = sshll.u32 %s2043, 4
          %s2055 = int_to_ptr.vmem [resolvable:$true] %s2054
          %2057 = dma.vmem_to_hbm [thread:$0]  %s2055, 128, %s2052, %s2040
        $region44: #{simple_nn_forward.1} parent=39 // pred_fallthru
          _
      $region40: #{simple_nn_forward.1} parent=5 // pred_fallthru
        _
      %p2058 = scmp.le.s32.totalorder 2, %s16
      // Predicated region
      $region45: #{simple_nn_forward.1} parent=5 // pred_check
        %p2059 = pneg %p2058
      $region46: #{simple_nn_forward.1} parent=5 // pred_check_branch
        %2061 = sbr.rel (%p2059) target = $region48
      $region47: #{simple_nn_forward.1} parent=5 // pred_region
        %s2062 = ssub.s32 %s16, 2
        // Predicated region
        $region49: #{simple_nn_forward.1} parent=47 // pred_check
          %p2063 = pneg %p155
        $region50: #{simple_nn_forward.1} parent=47 // pred_check_branch
          %2065 = sbr.rel (%p2063) target = $region52
        $region51: #{simple_nn_forward.1} parent=47 // pred_region
          %s2066 = sand.u32 %s140, 1
          %s2067 = scalar_lea.sflag [#allocation4], %s2066
          %s2068 = sand.u32 %s140, 1
          %s2069 = smul.addr %s2068, 8
          %s2070 = scalar_lea.vmem [#allocation3], %s2069
          %2071 = dma.done %s2067, 128
        $region52: #{simple_nn_forward.1} parent=47 // pred_fallthru
          _
      $region48: #{simple_nn_forward.1} parent=5 // pred_fallthru
        _
    $region6: #{simple_nn_forward.1} parent=1 // loop_footer
      %s20 = sadd.s32 1, %s16
    $region7: #{simple_nn_forward.1} parent=1 // loop_footer_branch
      %15 = sbr.rel target = $region3
    $region8: #{simple_nn_forward.1} parent=1 // loop_exit
      _
    %2072 = vsyncpa [#allocation4], 1
    %s2073 = scalar_lea.sflag [#allocation4], 1
    %2074 = vsyncpa %s2073, 1

</llo_original>
